<compile_context>
chip_gen: v5e
topology: v5e:2x2
jax: 0.10.0
libtpu: 0.0.40
codegen_flags: <defaults>
</compile_context>

<pallas_src>
import math
from functools import partial

import jax
import jax.numpy as jnp
from jax import lax
from jax.experimental import pallas as pl
from jax.experimental.pallas import tpu as pltpu

_NORM_EPS = 1e-12          # F.normalize eps (supervoice RMSNorm)
_NEG_INF = -1e30           # finite "-inf": keeps flash stats NaN-free


def _vmem_limit_bytes():
    """Per-generation scoped-VMEM budget: ~85% of capacity, never 100%."""
    cap = 128 * 1024 * 1024
    try:
        info = pltpu.get_tpu_info()
        cap = int(getattr(info, "vmem_capacity_bytes", cap) or cap)
    except Exception:
        pass
    return max(32 * 1024 * 1024, min(int(cap * 0.85), cap - 8 * 1024 * 1024))


def _erf_approx(x):
    """Abramowitz & Stegun 7.1.26 erf (max abs err ~1.5e-7); exp goes to EUP."""
    # TODO(synk): switch to lax.erf if/when Mosaic guarantees an exact erf lowering.
    a1, a2, a3, a4, a5 = (0.254829592, -0.284496736, 1.421413741,
                          -1.453152027, 1.061405429)
    p = 0.3275911
    ax = jnp.abs(x)
    t = 1.0 / (1.0 + p * ax)
    poly = t * (a1 + t * (a2 + t * (a3 + t * (a4 + t * a5))))
    y = 1.0 - poly * jnp.exp(-ax * ax)
    return jnp.where(x >= 0, y, -y)


def _gelu(x, approximate):
    if approximate:
        return jax.nn.gelu(x, approximate=True)      # tanh -> EUP
    return 0.5 * x * (1.0 + _erf_approx(x * (1.0 / math.sqrt(2.0))))


# ---------------------------------------------------------------------------
# Kernel 1: RMSNorm -> fused QKV projection -> full-width RoPE -> lane-dense q/k/v
# ---------------------------------------------------------------------------
def _qkv_rope_kernel(x_ref, g1_ref, wqkv_ref, *rest, n_heads, n_dim_head,
                     use_rope, compute_dtype):
    if use_rope:
        cos_ref, sin_ref, q_ref, k_ref, v_ref = rest
    else:
        q_ref, k_ref, v_ref = rest

    H, D = n_heads, n_dim_head
    HD = H * D
    x = x_ref[0]                                        # (ts, C) f32
    ts, C = x.shape

    # RMSNorm (attention_ln): F.normalize(x, dim=-1) * sqrt(C) * gamma
    norm = jnp.sqrt(jnp.sum(x * x, axis=-1, keepdims=True))
    y = x / jnp.maximum(norm, _NORM_EPS) * jnp.float32(math.sqrt(C)) * g1_ref[0]

    # Fused bias-free QKV projection on the MXU, f32 accumulation.
    qkv = jnp.dot(y.astype(compute_dtype), wqkv_ref[...],
                  preferred_element_type=jnp.float32)   # (ts, 3*HD)
    q = qkv[:, 0 * HD:1 * HD]
    k = qkv[:, 1 * HD:2 * HD]
    v = qkv[:, 2 * HD:3 * HD]

    if use_rope:
        # cos/sin stream as (ts, D); xH lane tiling happens in-vreg (cheap)
        cos = jnp.tile(cos_ref[...], (1, H))            # (ts, HD)
        sin = jnp.tile(sin_ref[...], (1, H))
        half = D // 2
        lane = lax.broadcasted_iota(jnp.int32, (ts, HD), 1)
        first_half = (lane % D) < half

        def _rope(t):
            # rotate_half within every head block at full (ts, HD) lane width;
            # pltpu.roll keeps the rotation on the XLU slot.
            fwd = pltpu.roll(t, HD - half, axis=1)      # t[:, c + D/2]
            bwd = pltpu.roll(t, half, axis=1)           # t[:, c - D/2]
            rot = jnp.where(first_half, -fwd, bwd)
            return t * cos + rot * sin

        q = _rope(q)
        k = _rope(k)

    # Fold the softmax 1/sqrt(D) scaling into q (T*HD muls instead of T*T).
    q = q * jnp.float32(1.0 / math.sqrt(D))

    # Lane-dense stores: one unmasked full-width vst per tensor.
    q_ref[0] = q.astype(q_ref.dtype)
    k_ref[0] = k.astype(k_ref.dtype)
    v_ref[0] = v.astype(v_ref.dtype)


# ---------------------------------------------------------------------------
# Kernel 2: flash attention (batched heads) + output proj + residual + MLP.
# ---------------------------------------------------------------------------
def _flash_attn_mlp_kernel(x_ref, q_ref, k_ref, v_ref, wo_ref, g2_ref,
                           w1_ref, b1_ref, w2_ref, b2_ref, *rest,
                           n_heads, n_dim_head, alibi_mode, compute_dtype,
                           approx_recip, gelu_approximate):
    if alibi_mode == "none":
        bias_ref = None
        o_ref, m_sc, l_sc, acc_sc = rest
    else:
        bias_ref, o_ref, m_sc, l_sc, acc_sc = rest

    H, D = n_heads, n_dim_head
    HD = H * D
    qi = pl.program_id(1)
    ki = pl.program_id(2)
    bf16_pipeline = jnp.dtype(compute_dtype) != jnp.dtype(jnp.float32)

    @pl.when(ki == 0)
    def _init():
        m_sc[...] = jnp.full(m_sc.shape, _NEG_INF, dtype=m_sc.dtype)
        l_sc[...] = jnp.zeros(l_sc.shape, dtype=l_sc.dtype)
        acc_sc[...] = jnp.zeros(acc_sc.shape, dtype=acc_sc.dtype)

    tq = q_ref.shape[1]
    tkv = k_ref.shape[1]

    def split_heads(t):         # (n, H*D) -> (H, n, D); in-vreg, overlaps MXU
        return jnp.stack([t[:, h * D:(h + 1) * D] for h in range(H)], axis=0)

    q = split_heads(q_ref[0])   # (H, tq, D)  (pre-scaled by 1/sqrt(D))
    k = split_heads(k_ref[0])   # (H, tkv, D)
    v = split_heads(v_ref[0])   # (H, tkv, D)

    # Batched-head scores on the MXU, f32 accumulation.
    s = jnp.einsum("hqd,hkd->hqk", q, k,
                   preferred_element_type=jnp.float32)  # (H, tq, tkv)

    if alibi_mode == "slopes":
        # Build -slope_h * |i - j| for this (q, kv) tile on the fly.
        rows = lax.broadcasted_iota(jnp.int32, (tq, tkv), 0) + qi * tq
        cols = lax.broadcasted_iota(jnp.int32, (tq, tkv), 1) + ki * tkv
        dist = jnp.abs(rows - cols).astype(jnp.float32)          # (tq, tkv)
        s = s + bias_ref[...][:, :, None] * dist[None, :, :]     # (H,1,1)*(1,tq,tkv)
    elif alibi_mode == "mask":
        # (1 or H, tq, tkv) tile; broadcasts across heads when 1-wide.
        s = s + bias_ref[...].astype(jnp.float32)

    # Online-softmax (flash) update; statistics stay f32.
    m_prev = m_sc[...]
    m_new = jnp.maximum(m_prev, jnp.max(s, axis=-1, keepdims=True))
    alpha = jnp.exp(m_prev - m_new)
    s_shift = s - m_new
    if bf16_pipeline:
        p = jnp.exp(s_shift.astype(compute_dtype))               # bf16 EUP exp
        l_add = jnp.sum(p, axis=-1, keepdims=True, dtype=jnp.float32)
    else:
        p = jnp.exp(s_shift)
        l_add = jnp.sum(p, axis=-1, keepdims=True)
    l_sc[...] = alpha * l_sc[...] + l_add
    acc_sc[...] = alpha * acc_sc[...] + jnp.einsum(
        "hqk,hkd->hqd", p.astype(v.dtype), v, preferred_element_type=jnp.float32)
    m_sc[...] = m_new

    # Epilogue on the last KV tile: normalize, out-proj, residual, RMSNorm, MLP.
    @pl.when(ki == pl.num_programs(2) - 1)
    def _epilogue():
        if approx_recip:
            inv_l = pl.reciprocal(l_sc[...], approx=True)        # EUP slot
        else:
            inv_l = 1.0 / l_sc[...]
        att = acc_sc[...] * inv_l                                # (H, tq, D) f32
        att = jnp.concatenate([att[h] for h in range(H)], axis=1)  # (tq, HD) in-vreg

        xr = x_ref[0]                                            # (tq, C) f32 residual
        C = xr.shape[-1]
        sqrt_c = jnp.float32(math.sqrt(C))
        y = xr + jnp.dot(att.astype(compute_dtype), wo_ref[...],
                         preferred_element_type=jnp.float32)

        norm = jnp.sqrt(jnp.sum(y * y, axis=-1, keepdims=True))
        z = y / jnp.maximum(norm, _NORM_EPS) * sqrt_c * g2_ref[0]
        h1 = jnp.dot(z.astype(compute_dtype), w1_ref[...],
                     preferred_element_type=jnp.float32) + b1_ref[0]
        h1 = _gelu(h1, gelu_approximate)
        h2 = jnp.dot(h1.astype(compute_dtype), w2_ref[...],
                     preferred_element_type=jnp.float32) + b2_ref[0]
        o_ref[0] = (y + h2).astype(o_ref.dtype)


# ---------------------------------------------------------------------------
# Wrapper
# ---------------------------------------------------------------------------
def attention_block(x, params, rotational=None, alibi=None, alibi_slopes=None,
                    *, n_heads, n_dim_head, compute_dtype=jnp.float32,
                    block_q=None, block_kv=None, block_s=None,
                    gelu_approximate=False):
    """Forward pass of supervoice AttentionBlock (eval mode: dropout = 0).

    x            : (B, T, C) float32
    rotational   : optional (T, n_dim_head) rotary angles
    alibi        : optional dense additive mask, (T, T), (1, T, T) or (H, T, T)
    alibi_slopes : optional (H,) per-head ALiBi slopes; bias = -slope * |i - j|
                   is built inside the kernel (never materialized in HBM).
    compute_dtype: dtype fed to the MXU matmuls / softmax pipeline (bf16
                   recommended on TPU); stats, norms and residuals stay f32.
    """
    if alibi is not None and alibi_slopes is not None:
        raise ValueError("pass either `alibi` or `alibi_slopes`, not both")

    B, T, C = x.shape
    H, D = n_heads, n_dim_head
    HD = H * D
    F = params["w1"].shape[1]
    cdt = jnp.dtype(compute_dtype)

    # ------------------------- block-size selection -------------------------
    if block_s is None:
        block_s = 512
    if block_q is None:
        block_q = 512
    if block_kv is None:
        # Fold the KV axis away entirely when K+V for one batch row are small
        # (removes the online-softmax recurrence + per-step overhead).
        block_kv = T if 2 * T * HD * cdt.itemsize <= 8 * 1024 * 1024 else 256
    block_q = min(block_q, T)
    block_kv = min(block_kv, T)
    block_s = min(block_s, T)
    # Keep >=2 parallel grid steps so multi-TC chips (v7x) shard the work.
    while B * (T // block_q) < 2 and block_q % 2 == 0 and block_q > 8 \
            and T % (block_q // 2) == 0:
        block_q //= 2
    # TODO(synk): pad/mask ragged T instead of requiring exact tile divisibility.
    assert T % block_q == 0 and T % block_kv == 0 and T % block_s == 0
    assert all(b % 8 == 0 or b == T for b in (block_q, block_kv, block_s))

    use_rope = rotational is not None
    alibi_mode = "slopes" if alibi_slopes is not None else (
        "mask" if alibi is not None else "none")

    # ----------------------------- operand prep -----------------------------
    x = x.astype(jnp.float32)
    g1 = params["g1"].reshape(1, C).astype(jnp.float32)
    g2 = params["g2"].reshape(1, C).astype(jnp.float32)
    b1 = params["b1"].reshape(1, F).astype(jnp.float32)
    b2 = params["b2"].reshape(1, C).astype(jnp.float32)
    wqkv = params["wqkv"].astype(cdt)
    wo = params["wo"].astype(cdt)
    w1 = params["w1"].astype(cdt)
    w2 = params["w2"].astype(cdt)

    if use_rope:
        rot = jnp.asarray(rotational, jnp.float32)               # (T, D)
        cos, sin = jnp.cos(rot), jnp.sin(rot)

    if alibi_mode == "slopes":
        neg_slopes = (-jnp.asarray(alibi_slopes, jnp.float32)).reshape(H, 1)
    elif alibi_mode == "mask":
        mask = jnp.asarray(alibi)
        if mask.ndim == 2:
            mask = mask[None]
        assert mask.ndim == 3 and mask.shape[-2:] == (T, T)
        assert mask.shape[0] in (1, H)
        # TODO(synk): per-batch (B, H, T, T) masks need a batch-indexed BlockSpec.
        assert block_kv % 128 == 0 or block_kv == T
        mask = mask.astype(cdt)
        Hm = mask.shape[0]

    vmem_limit = _vmem_limit_bytes()

    def _run(single_buffer):
        # Grid-invariant operands get a single VMEM buffer (no double-buffering).
        inv = dict(pipeline_mode=pl.Buffered(1)) if single_buffer else {}

        # ---------------- kernel 1: RMSNorm + QKV + RoPE -------------------
        k1_inputs = [x, g1, wqkv]
        k1_specs = [
            pl.BlockSpec((1, block_s, C), lambda b, s: (b, s, 0)),
            pl.BlockSpec((1, C), lambda b, s: (0, 0), **inv),
            pl.BlockSpec((C, 3 * HD), lambda b, s: (0, 0), **inv),
        ]
        if use_rope:
            k1_inputs += [cos, sin]
            k1_specs += [pl.BlockSpec((block_s, D), lambda b, s: (s, 0))] * 2

        qkv_struct = jax.ShapeDtypeStruct((B, T, HD), cdt)       # lane-dense
        qkv_spec = pl.BlockSpec((1, block_s, HD), lambda b, s: (b, s, 0))
        q, k, v = pl.pallas_call(
            partial(_qkv_rope_kernel, n_heads=H, n_dim_head=D,
                    use_rope=use_rope, compute_dtype=cdt),
            out_shape=(qkv_struct,) * 3,
            grid=(B, T // block_s),
            in_specs=k1_specs,
            out_specs=(qkv_spec,) * 3,
            compiler_params=pltpu.CompilerParams(
                dimension_semantics=("parallel", "parallel"),
                vmem_limit_bytes=vmem_limit),
        )(*k1_inputs)

        # ------- kernel 2: flash attention + out proj + residual + MLP -----
        k2_inputs = [x, q, k, v, wo, g2, w1, b1, w2, b2]
        k2_specs = [
            pl.BlockSpec((1, block_q, C), lambda b, qi, ki: (b, qi, 0)),
            pl.BlockSpec((1, block_q, HD), lambda b, qi, ki: (b, qi, 0)),
            pl.BlockSpec((1, block_kv, HD), lambda b, qi, ki: (b, ki, 0)),
            pl.BlockSpec((1, block_kv, HD), lambda b, qi, ki: (b, ki, 0)),
            pl.BlockSpec((HD, C), lambda b, qi, ki: (0, 0), **inv),
            pl.BlockSpec((1, C), lambda b, qi, ki: (0, 0), **inv),
            pl.BlockSpec((C, F), lambda b, qi, ki: (0, 0), **inv),
            pl.BlockSpec((1, F), lambda b, qi, ki: (0, 0), **inv),
            pl.BlockSpec((F, C), lambda b, qi, ki: (0, 0), **inv),
            pl.BlockSpec((1, C), lambda b, qi, ki: (0, 0), **inv),
        ]
        if alibi_mode == "slopes":
            k2_inputs.append(neg_slopes)
            k2_specs.append(pl.BlockSpec((H, 1), lambda b, qi, ki: (0, 0), **inv))
        elif alibi_mode == "mask":
            k2_inputs.append(mask)
            k2_specs.append(pl.BlockSpec((Hm, block_q, block_kv),
                                         lambda b, qi, ki: (0, qi, ki)))

        approx_recip = cdt != jnp.dtype(jnp.float32)
        return pl.pallas_call(
            partial(_flash_attn_mlp_kernel, n_heads=H, n_dim_head=D,
                    alibi_mode=alibi_mode, compute_dtype=cdt,
                    approx_recip=approx_recip, gelu_approximate=gelu_approximate),
            out_shape=jax.ShapeDtypeStruct((B, T, C), jnp.float32),
            grid=(B, T // block_q, T // block_kv),
            in_specs=k2_specs,
            out_specs=pl.BlockSpec((1, block_q, C), lambda b, qi, ki: (b, qi, 0)),
            scratch_shapes=[
                pltpu.VMEM((H, block_q, 1), jnp.float32),     # running max
                pltpu.VMEM((H, block_q, 1), jnp.float32),     # running denom
                pltpu.VMEM((H, block_q, D), jnp.float32),     # unnormalized accum
            ],
            compiler_params=pltpu.CompilerParams(
                dimension_semantics=("parallel", "parallel", "arbitrary"),
                vmem_limit_bytes=vmem_limit),
        )(*k2_inputs)

    try:
        return _run(single_buffer=True)
    except Exception:
        # pl.Buffered(1) single-buffering unavailable on this JAX/libtpu combo;
        # fall back to default (double-buffered) grid-invariant operands.
        return _run(single_buffer=False)


# --------------------------- pure-JAX reference ---------------------------
def _reference(x, params, rotational, bias, n_heads, n_dim_head):
    B, T, C = x.shape
    HD = n_heads * n_dim_head
    sqrt_c = math.sqrt(C)

    def rmsnorm(t, g):
        n = jnp.sqrt(jnp.sum(t * t, axis=-1, keepdims=True))
        return t / jnp.maximum(n, 1e-12) * sqrt_c * g

    def rot_half(t):
        t1, t2 = jnp.split(t, 2, axis=-1)
        return jnp.concatenate([-t2, t1], axis=-1)

    y = rmsnorm(x, params["g1"])
    qkv = y @ params["wqkv"]
    q, k, v = jnp.split(qkv, 3, axis=-1)
    reshape = lambda t: t.reshape(B, T, n_heads, n_dim_head).transpose(0, 2, 1, 3)
    q, k, v = map(reshape, (q, k, v))
    if rotational is not None:
        cos, sin = jnp.cos(rotational), jnp.sin(rotational)
        q = q * cos + rot_half(q) * sin
        k = k * cos + rot_half(k) * sin
    s = jnp.einsum("bhqd,bhkd->bhqk", q, k) / math.sqrt(n_dim_head)
    if bias is not None:
        s = s + bias
    p = jax.nn.softmax(s, axis=-1)
    o = jnp.einsum("bhqk,bhkd->bhqd", p, v)
    o = o.transpose(0, 2, 1, 3).reshape(B, T, HD)
    y = x + o @ params["wo"]
    z = rmsnorm(y, params["g2"])
    h = jax.nn.gelu(z @ params["w1"] + params["b1"], approximate=False)
    return y + h @ params["w2"] + params["b2"]


if __name__ == "__main__":
    B, T, C = 2, 32, 128
    n_heads, n_dim_head, n_dim_ffn = 2, 64, 256
    HD = n_heads * n_dim_head

    key = jax.random.PRNGKey(0)
    kx, k1, k2, k3, k4, k5, k6, kr = jax.random.split(key, 8)

    params = {
        "g1": jnp.ones((C,), jnp.float32),                               # RMSNorm gamma
        "g2": jnp.ones((C,), jnp.float32),
        "wqkv": 0.02 * jax.random.normal(k1, (C, 3 * HD), jnp.float32),  # attention.weight.T
        "wo": 0.02 * jax.random.normal(k2, (HD, C), jnp.float32),        # attention_output.weight.T
        "w1": 0.02 * jax.random.normal(k3, (C, n_dim_ffn), jnp.float32), # mlp_input.weight.T
        "b1": 0.02 * jax.random.normal(k4, (n_dim_ffn,), jnp.float32),
        "w2": 0.02 * jax.random.normal(k5, (n_dim_ffn, C), jnp.float32), # mlp_output.weight.T
        "b2": 0.02 * jax.random.normal(k6, (C,), jnp.float32),
    }
    x = jax.random.normal(kx, (B, T, C), jnp.float32)
    rotational = 0.1 * jax.random.normal(kr, (T, n_dim_head), jnp.float32)
    slopes = jnp.array([0.25, 0.0625], jnp.float32)           # per-head ALiBi slopes

    run = partial(attention_block, n_heads=n_heads, n_dim_head=n_dim_head,
                  block_q=16, block_kv=16, block_s=16)        # multiple q/kv/s tiles

    # 1) f32, RoPE, no alibi: flash accumulation across 2 KV tiles exercised.
    out = jax.block_until_ready(run(x, params, rotational=rotational))
    ref = _reference(x, params, rotational, None, n_heads, n_dim_head)
    assert out.shape == (B, T, C)
    err = float(jnp.max(jnp.abs(out - ref)))
    assert jnp.allclose(out, ref, rtol=1e-4, atol=1e-4), err

    # 2) f32, RoPE, ALiBi built in-kernel from per-head slopes.
    pos = jnp.arange(T, dtype=jnp.float32)
    bias = -slopes[:, None, None] * jnp.abs(pos[:, None] - pos[None, :])  # (H, T, T)
    out = jax.block_until_ready(run(x, params, rotational=rotational,
                                    alibi_slopes=slopes))
    ref = _reference(x, params, rotational, bias, n_heads, n_dim_head)
    err = float(jnp.max(jnp.abs(out - ref)))
    assert jnp.allclose(out, ref, rtol=1e-4, atol=1e-4), err

    # 3) f32, no RoPE, dense (T, T) additive mask streamed in tiles, broadcast over heads.
    mask2d = bias[0]
    out = jax.block_until_ready(
        attention_block(x, params, alibi=mask2d, n_heads=n_heads,
                        n_dim_head=n_dim_head, block_q=16, block_kv=T, block_s=16))
    ref = _reference(x, params, None, mask2d[None], n_heads, n_dim_head)
    err = float(jnp.max(jnp.abs(out - ref)))
    assert jnp.allclose(out, ref, rtol=1e-4, atol=1e-4), err

    # 4) bf16 MXU matmuls + bf16 softmax pipeline (f32 stats / norms), loose tol.
    out = jax.block_until_ready(run(x, params, rotational=rotational,
                                    compute_dtype=jnp.bfloat16))
    ref = _reference(x, params, rotational, None, n_heads, n_dim_head)
    err = float(jnp.max(jnp.abs(out - ref)))
    assert jnp.allclose(out, ref, rtol=5e-2, atol=5e-2), err

    print("KERNEL_OK")
</pallas_src>

<mosaic_0001>
module attributes {stable_mosaic.version = 11 : i64} {
  func.func @_qkv_rope_kernel(%arg0: i32, %arg1: i32, %arg2: memref<1x16x128xf32, #tpu.memory_space<vmem>>, %arg3: memref<1x128xf32, #tpu.memory_space<vmem>>, %arg4: memref<128x384xf32, #tpu.memory_space<vmem>>, %arg5: memref<16x64xf32, #tpu.memory_space<vmem>>, %arg6: memref<16x64xf32, #tpu.memory_space<vmem>>, %arg7: memref<1x16x128xf32, #tpu.memory_space<vmem>>, %arg8: memref<1x16x128xf32, #tpu.memory_space<vmem>>, %arg9: memref<1x16x128xf32, #tpu.memory_space<vmem>>) attributes {dimension_semantics = [#tpu.dimension_semantics<parallel>, #tpu.dimension_semantics<parallel>], iteration_bounds = array<i64: 2, 2>, scalar_prefetch = 0 : i64, scratch_operands = 0 : i64, tpu.core_type = #tpu.core_type<tc>, window_params = [{transform_indices = @transform_0, window_bounds = array<i64: 1, 16, 128>}, {pipeline_mode = #tpu.pipeline_mode<synchronous>, transform_indices = @transform_1, window_bounds = array<i64: 1, 128>}, {pipeline_mode = #tpu.pipeline_mode<synchronous>, transform_indices = @transform_2, window_bounds = array<i64: 128, 384>}, {transform_indices = @transform_3, window_bounds = array<i64: 16, 64>}, {transform_indices = @transform_4, window_bounds = array<i64: 16, 64>}, {transform_indices = @transform_5, window_bounds = array<i64: 1, 16, 128>}, {transform_indices = @transform_6, window_bounds = array<i64: 1, 16, 128>}, {transform_indices = @transform_7, window_bounds = array<i64: 1, 16, 128>}]} {
    %c0 = arith.constant 0 : index
    %c0_0 = arith.constant 0 : index
    %c0_1 = arith.constant 0 : index
    %0 = vector.load %arg2[%c0, %c0_0, %c0_1] : memref<1x16x128xf32, #tpu.memory_space<vmem>>, vector<1x16x128xf32>
    %1 = vector.shape_cast %0 : vector<1x16x128xf32> to vector<16x128xf32>
    %2 = arith.mulf %1, %1 : vector<16x128xf32>
    %cst = arith.constant dense<0.000000e+00> : vector<16xf32>
    %3 = vector.multi_reduction <add>, %2, %cst [1] : vector<16x128xf32> to vector<16xf32>
    %4 = vector.shape_cast %3 : vector<16xf32> to vector<16x1xf32>
    %5 = math.sqrt %4 : vector<16x1xf32>
    %cst_2 = arith.constant 9.99999996E-13 : f32
    %6 = vector.broadcast %cst_2 : f32 to vector<16x1xf32>
    %7 = arith.maximumf %5, %6 : vector<16x1xf32>
    %8 = vector.broadcast %7 : vector<16x1xf32> to vector<16x128xf32>
    %9 = arith.divf %1, %8 : vector<16x128xf32>
    %cst_3 = arith.constant 11.3137083 : f32
    %10 = vector.broadcast %cst_3 : f32 to vector<16x128xf32>
    %11 = arith.mulf %9, %10 : vector<16x128xf32>
    %c0_4 = arith.constant 0 : index
    %c0_5 = arith.constant 0 : index
    %12 = vector.load %arg3[%c0_4, %c0_5] : memref<1x128xf32, #tpu.memory_space<vmem>>, vector<1x128xf32>
    %13 = vector.shape_cast %12 : vector<1x128xf32> to vector<128xf32>
    %14 = vector.shape_cast %13 : vector<128xf32> to vector<1x128xf32>
    %15 = vector.broadcast %14 : vector<1x128xf32> to vector<16x128xf32>
    %16 = arith.mulf %11, %15 : vector<16x128xf32>
    %c0_6 = arith.constant 0 : index
    %c0_7 = arith.constant 0 : index
    %17 = vector.load %arg4[%c0_6, %c0_7] : memref<128x384xf32, #tpu.memory_space<vmem>>, vector<128x384xf32>
    %cst_8 = arith.constant dense<0.000000e+00> : vector<16x384xf32>
    %18 = tpu.matmul %16, %17, %cst_8 {dimension_numbers = #tpu.dot_dimension_numbers<[1], [0], [0], [1], [0, 0, 1, 1], [], []>} : vector<16x128xf32>, vector<128x384xf32>, vector<16x384xf32> -> vector<16x384xf32>
    %19 = vector.extract_strided_slice %18 {offsets = [0, 0], sizes = [16, 128], strides = [1, 1]} : vector<16x384xf32> to vector<16x128xf32>
    %20 = vector.extract_strided_slice %18 {offsets = [0, 128], sizes = [16, 128], strides = [1, 1]} : vector<16x384xf32> to vector<16x128xf32>
    %21 = vector.extract_strided_slice %18 {offsets = [0, 256], sizes = [16, 128], strides = [1, 1]} : vector<16x384xf32> to vector<16x128xf32>
    %c0_9 = arith.constant 0 : index
    %c0_10 = arith.constant 0 : index
    %22 = vector.load %arg5[%c0_9, %c0_10] : memref<16x64xf32, #tpu.memory_space<vmem>>, vector<16x64xf32>
    %23 = tpu.concatenate %22, %22 in 1 : vector<16x64xf32>, vector<16x64xf32> -> vector<16x128xf32>
    %c0_11 = arith.constant 0 : index
    %c0_12 = arith.constant 0 : index
    %24 = vector.load %arg6[%c0_11, %c0_12] : memref<16x64xf32, #tpu.memory_space<vmem>>, vector<16x64xf32>
    %25 = tpu.concatenate %24, %24 in 1 : vector<16x64xf32>, vector<16x64xf32> -> vector<16x128xf32>
    %26 = tpu.iota {dimensions = array<i32: 1>} : vector<16x128xi32>
    %c64_i32 = arith.constant 64 : i32
    %c0_i32 = arith.constant 0 : i32
    %27 = arith.cmpi eq, %c64_i32, %c0_i32 : i32
    %c1_i32 = arith.constant 1 : i32
    %28 = arith.select %27, %c1_i32, %c64_i32 : i32
    %29 = vector.broadcast %28 : i32 to vector<16x128xi32>
    %30 = arith.remsi %26, %29 : vector<16x128xi32>
    %c0_i32_13 = arith.constant 0 : i32
    %31 = vector.broadcast %c0_i32_13 : i32 to vector<16x128xi32>
    %32 = arith.cmpi ne, %30, %31 : vector<16x128xi32>
    %c0_i32_14 = arith.constant 0 : i32
    %33 = vector.broadcast %c0_i32_14 : i32 to vector<16x128xi32>
    %34 = arith.cmpi slt, %30, %33 : vector<16x128xi32>
    %c0_i32_15 = arith.constant 0 : i32
    %35 = arith.cmpi slt, %28, %c0_i32_15 : i32
    %36 = vector.broadcast %35 : i1 to vector<16x128xi1>
    %37 = vector.broadcast %36 : vector<16x128xi1> to vector<16x128xi1>
    %38 = arith.xori %34, %37 : vector<16x128xi1>
    %39 = arith.andi %38, %32 : vector<16x128xi1>
    %40 = vector.broadcast %28 : i32 to vector<16x128xi32>
    %41 = arith.addi %30, %40 : vector<16x128xi32>
    %42 = arith.select %39, %41, %30 : vector<16x128xi1>, vector<16x128xi32>
    %c32_i32 = arith.constant 32 : i32
    %43 = vector.broadcast %c32_i32 : i32 to vector<16x128xi32>
    %44 = arith.cmpi slt, %42, %43 : vector<16x128xi32>
    %c96_i32 = arith.constant 96 : i32
    %45 = tpu.dynamic_rotate %19 by %c96_i32 dim 1 : vector<16x128xf32>, i32 -> vector<16x128xf32>
    %c32_i32_16 = arith.constant 32 : i32
    %46 = tpu.dynamic_rotate %19 by %c32_i32_16 dim 1 : vector<16x128xf32>, i32 -> vector<16x128xf32>
    %cst_17 = arith.constant 0.000000e+00 : f32
    %47 = vector.broadcast %cst_17 : f32 to vector<16x128xf32>
    %48 = arith.subf %47, %45 : vector<16x128xf32>
    %49 = arith.select %44, %48, %46 : vector<16x128xi1>, vector<16x128xf32>
    %50 = arith.mulf %19, %23 : vector<16x128xf32>
    %51 = arith.mulf %49, %25 : vector<16x128xf32>
    %52 = arith.addf %50, %51 : vector<16x128xf32>
    %c96_i32_18 = arith.constant 96 : i32
    %53 = tpu.dynamic_rotate %20 by %c96_i32_18 dim 1 : vector<16x128xf32>, i32 -> vector<16x128xf32>
    %c32_i32_19 = arith.constant 32 : i32
    %54 = tpu.dynamic_rotate %20 by %c32_i32_19 dim 1 : vector<16x128xf32>, i32 -> vector<16x128xf32>
    %cst_20 = arith.constant 0.000000e+00 : f32
    %55 = vector.broadcast %cst_20 : f32 to vector<16x128xf32>
    %56 = arith.subf %55, %53 : vector<16x128xf32>
    %57 = arith.select %44, %56, %54 : vector<16x128xi1>, vector<16x128xf32>
    %58 = arith.mulf %20, %23 : vector<16x128xf32>
    %59 = arith.mulf %57, %25 : vector<16x128xf32>
    %60 = arith.addf %58, %59 : vector<16x128xf32>
    %cst_21 = arith.constant 1.250000e-01 : f32
    %61 = vector.broadcast %cst_21 : f32 to vector<16x128xf32>
    %62 = arith.mulf %52, %61 : vector<16x128xf32>
    %c0_22 = arith.constant 0 : index
    %c0_23 = arith.constant 0 : index
    %c0_24 = arith.constant 0 : index
    %63 = vector.load %arg7[%c0_22, %c0_23, %c0_24] : memref<1x16x128xf32, #tpu.memory_space<vmem>>, vector<1x16x128xf32>
    %64 = vector.shape_cast %63 : vector<1x16x128xf32> to vector<16x128xf32>
    %65 = vector.shape_cast %62 : vector<16x128xf32> to vector<1x16x128xf32>
    tpu.vector_store %arg7[%c0_22, %c0_23, %c0_24], %65 {strides = array<i32>} : memref<1x16x128xf32, #tpu.memory_space<vmem>>, vector<1x16x128xf32>,
    %c0_25 = arith.constant 0 : index
    %c0_26 = arith.constant 0 : index
    %c0_27 = arith.constant 0 : index
    %66 = vector.load %arg8[%c0_25, %c0_26, %c0_27] : memref<1x16x128xf32, #tpu.memory_space<vmem>>, vector<1x16x128xf32>
    %67 = vector.shape_cast %66 : vector<1x16x128xf32> to vector<16x128xf32>
    %68 = vector.shape_cast %60 : vector<16x128xf32> to vector<1x16x128xf32>
    tpu.vector_store %arg8[%c0_25, %c0_26, %c0_27], %68 {strides = array<i32>} : memref<1x16x128xf32, #tpu.memory_space<vmem>>, vector<1x16x128xf32>,
    %c0_28 = arith.constant 0 : index
    %c0_29 = arith.constant 0 : index
    %c0_30 = arith.constant 0 : index
    %69 = vector.load %arg9[%c0_28, %c0_29, %c0_30] : memref<1x16x128xf32, #tpu.memory_space<vmem>>, vector<1x16x128xf32>
    %70 = vector.shape_cast %69 : vector<1x16x128xf32> to vector<16x128xf32>
    %71 = vector.shape_cast %21 : vector<16x128xf32> to vector<1x16x128xf32>
    tpu.vector_store %arg9[%c0_28, %c0_29, %c0_30], %71 {strides = array<i32>} : memref<1x16x128xf32, #tpu.memory_space<vmem>>, vector<1x16x128xf32>,
    return
  }
  func.func @transform_0(%arg0: i32, %arg1: i32) -> (i32, i32, i32) {
    %c0_i32 = arith.constant 0 : i32
    %c0_i32_0 = arith.constant 0 : i32
    return %arg0, %arg1, %c0_i32 : i32, i32, i32
  }
  func.func @transform_1(%arg0: i32, %arg1: i32) -> (i32, i32) {
    %c0_i32 = arith.constant 0 : i32
    %c0_i32_0 = arith.constant 0 : i32
    %c0_i32_1 = arith.constant 0 : i32
    return %c0_i32, %c0_i32_0 : i32, i32
  }
  func.func @transform_2(%arg0: i32, %arg1: i32) -> (i32, i32) {
    %c0_i32 = arith.constant 0 : i32
    %c0_i32_0 = arith.constant 0 : i32
    %c0_i32_1 = arith.constant 0 : i32
    return %c0_i32, %c0_i32_0 : i32, i32
  }
  func.func @transform_3(%arg0: i32, %arg1: i32) -> (i32, i32) {
    %c0_i32 = arith.constant 0 : i32
    %c0_i32_0 = arith.constant 0 : i32
    return %arg1, %c0_i32 : i32, i32
  }
  func.func @transform_4(%arg0: i32, %arg1: i32) -> (i32, i32) {
    %c0_i32 = arith.constant 0 : i32
    %c0_i32_0 = arith.constant 0 : i32
    return %arg1, %c0_i32 : i32, i32
  }
  func.func @transform_5(%arg0: i32, %arg1: i32) -> (i32, i32, i32) {
    %c0_i32 = arith.constant 0 : i32
    %c0_i32_0 = arith.constant 0 : i32
    return %arg0, %arg1, %c0_i32 : i32, i32, i32
  }
  func.func @transform_6(%arg0: i32, %arg1: i32) -> (i32, i32, i32) {
    %c0_i32 = arith.constant 0 : i32
    %c0_i32_0 = arith.constant 0 : i32
    return %arg0, %arg1, %c0_i32 : i32, i32, i32
  }
  func.func @transform_7(%arg0: i32, %arg1: i32) -> (i32, i32, i32) {
    %c0_i32 = arith.constant 0 : i32
    %c0_i32_0 = arith.constant 0 : i32
    return %arg0, %arg1, %c0_i32 : i32, i32, i32
  }
}

module attributes {stable_mosaic.version = 11 : i64} {
  func.func @_qkv_rope_kernel(%arg0: i32, %arg1: i32, %arg2: memref<1x16x128xf32, #tpu.memory_space<vmem>>, %arg3: memref<1x128xf32, #tpu.memory_space<vmem>>, %arg4: memref<128x384xf32, #tpu.memory_space<vmem>>, %arg5: memref<16x64xf32, #tpu.memory_space<vmem>>, %arg6: memref<16x64xf32, #tpu.memory_space<vmem>>, %arg7: memref<1x16x128xf32, #tpu.memory_space<vmem>>, %arg8: memref<1x16x128xf32, #tpu.memory_space<vmem>>, %arg9: memref<1x16x128xf32, #tpu.memory_space<vmem>>) attributes {dimension_semantics = [#tpu.dimension_semantics<parallel>, #tpu.dimension_semantics<parallel>], iteration_bounds = array<i64: 2, 2>, scalar_prefetch = 0 : i64, scratch_operands = 0 : i64, tpu.core_type = #tpu.core_type<tc>, window_params = [{transform_indices = @transform_0, window_bounds = array<i64: 1, 16, 128>}, {pipeline_mode = #tpu.pipeline_mode<synchronous>, transform_indices = @transform_1, window_bounds = array<i64: 1, 128>}, {pipeline_mode = #tpu.pipeline_mode<synchronous>, transform_indices = @transform_2, window_bounds = array<i64: 128, 384>}, {transform_indices = @transform_3, window_bounds = array<i64: 16, 64>}, {transform_indices = @transform_4, window_bounds = array<i64: 16, 64>}, {transform_indices = @transform_5, window_bounds = array<i64: 1, 16, 128>}, {transform_indices = @transform_6, window_bounds = array<i64: 1, 16, 128>}, {transform_indices = @transform_7, window_bounds = array<i64: 1, 16, 128>}]} {
    %c0 = arith.constant 0 : index
    %c0_0 = arith.constant 0 : index
    %c0_1 = arith.constant 0 : index
    %0 = vector.load %arg2[%c0, %c0_0, %c0_1] : memref<1x16x128xf32, #tpu.memory_space<vmem>>, vector<1x16x128xf32>
    %1 = vector.shape_cast %0 : vector<1x16x128xf32> to vector<16x128xf32>
    %2 = arith.mulf %1, %1 : vector<16x128xf32>
    %cst = arith.constant dense<0.000000e+00> : vector<16xf32>
    %3 = vector.multi_reduction <add>, %2, %cst [1] : vector<16x128xf32> to vector<16xf32>
    %4 = vector.shape_cast %3 : vector<16xf32> to vector<16x1xf32>
    %5 = math.sqrt %4 : vector<16x1xf32>
    %cst_2 = arith.constant 9.99999996E-13 : f32
    %6 = vector.broadcast %cst_2 : f32 to vector<16x1xf32>
    %7 = arith.maximumf %5, %6 : vector<16x1xf32>
    %8 = vector.broadcast %7 : vector<16x1xf32> to vector<16x128xf32>
    %9 = arith.divf %1, %8 : vector<16x128xf32>
    %cst_3 = arith.constant 11.3137083 : f32
    %10 = vector.broadcast %cst_3 : f32 to vector<16x128xf32>
    %11 = arith.mulf %9, %10 : vector<16x128xf32>
    %c0_4 = arith.constant 0 : index
    %c0_5 = arith.constant 0 : index
    %12 = vector.load %arg3[%c0_4, %c0_5] : memref<1x128xf32, #tpu.memory_space<vmem>>, vector<1x128xf32>
    %13 = vector.shape_cast %12 : vector<1x128xf32> to vector<128xf32>
    %14 = vector.shape_cast %13 : vector<128xf32> to vector<1x128xf32>
    %15 = vector.broadcast %14 : vector<1x128xf32> to vector<16x128xf32>
    %16 = arith.mulf %11, %15 : vector<16x128xf32>
    %c0_6 = arith.constant 0 : index
    %c0_7 = arith.constant 0 : index
    %17 = vector.load %arg4[%c0_6, %c0_7] : memref<128x384xf32, #tpu.memory_space<vmem>>, vector<128x384xf32>
    %cst_8 = arith.constant dense<0.000000e+00> : vector<16x384xf32>
    %18 = tpu.matmul %16, %17, %cst_8 {dimension_numbers = #tpu.dot_dimension_numbers<[1], [0], [0], [1], [0, 0, 1, 1], [], []>} : vector<16x128xf32>, vector<128x384xf32>, vector<16x384xf32> -> vector<16x384xf32>
    %19 = vector.extract_strided_slice %18 {offsets = [0, 0], sizes = [16, 128], strides = [1, 1]} : vector<16x384xf32> to vector<16x128xf32>
    %20 = vector.extract_strided_slice %18 {offsets = [0, 128], sizes = [16, 128], strides = [1, 1]} : vector<16x384xf32> to vector<16x128xf32>
    %21 = vector.extract_strided_slice %18 {offsets = [0, 256], sizes = [16, 128], strides = [1, 1]} : vector<16x384xf32> to vector<16x128xf32>
    %c0_9 = arith.constant 0 : index
    %c0_10 = arith.constant 0 : index
    %22 = vector.load %arg5[%c0_9, %c0_10] : memref<16x64xf32, #tpu.memory_space<vmem>>, vector<16x64xf32>
    %23 = tpu.concatenate %22, %22 in 1 : vector<16x64xf32>, vector<16x64xf32> -> vector<16x128xf32>
    %c0_11 = arith.constant 0 : index
    %c0_12 = arith.constant 0 : index
    %24 = vector.load %arg6[%c0_11, %c0_12] : memref<16x64xf32, #tpu.memory_space<vmem>>, vector<16x64xf32>
    %25 = tpu.concatenate %24, %24 in 1 : vector<16x64xf32>, vector<16x64xf32> -> vector<16x128xf32>
    %26 = tpu.iota {dimensions = array<i32: 1>} : vector<16x128xi32>
    %c64_i32 = arith.constant 64 : i32
    %c0_i32 = arith.constant 0 : i32
    %27 = arith.cmpi eq, %c64_i32, %c0_i32 : i32
    %c1_i32 = arith.constant 1 : i32
    %28 = arith.select %27, %c1_i32, %c64_i32 : i32
    %29 = vector.broadcast %28 : i32 to vector<16x128xi32>
    %30 = arith.remsi %26, %29 : vector<16x128xi32>
    %c0_i32_13 = arith.constant 0 : i32
    %31 = vector.broadcast %c0_i32_13 : i32 to vector<16x128xi32>
    %32 = arith.cmpi ne, %30, %31 : vector<16x128xi32>
    %c0_i32_14 = arith.constant 0 : i32
    %33 = vector.broadcast %c0_i32_14 : i32 to vector<16x128xi32>
    %34 = arith.cmpi slt, %30, %33 : vector<16x128xi32>
    %c0_i32_15 = arith.constant 0 : i32
    %35 = arith.cmpi slt, %28, %c0_i32_15 : i32
    %36 = vector.broadcast %35 : i1 to vector<16x128xi1>
    %37 = vector.broadcast %36 : vector<16x128xi1> to vector<16x128xi1>
    %38 = arith.xori %34, %37 : vector<16x128xi1>
    %39 = arith.andi %38, %32 : vector<16x128xi1>
    %40 = vector.broadcast %28 : i32 to vector<16x128xi32>
    %41 = arith.addi %30, %40 : vector<16x128xi32>
    %42 = arith.select %39, %41, %30 : vector<16x128xi1>, vector<16x128xi32>
    %c32_i32 = arith.constant 32 : i32
    %43 = vector.broadcast %c32_i32 : i32 to vector<16x128xi32>
    %44 = arith.cmpi slt, %42, %43 : vector<16x128xi32>
    %c96_i32 = arith.constant 96 : i32
    %45 = tpu.dynamic_rotate %19 by %c96_i32 dim 1 : vector<16x128xf32>, i32 -> vector<16x128xf32>
    %c32_i32_16 = arith.constant 32 : i32
    %46 = tpu.dynamic_rotate %19 by %c32_i32_16 dim 1 : vector<16x128xf32>, i32 -> vector<16x128xf32>
    %cst_17 = arith.constant 0.000000e+00 : f32
    %47 = vector.broadcast %cst_17 : f32 to vector<16x128xf32>
    %48 = arith.subf %47, %45 : vector<16x128xf32>
    %49 = arith.select %44, %48, %46 : vector<16x128xi1>, vector<16x128xf32>
    %50 = arith.mulf %19, %23 : vector<16x128xf32>
    %51 = arith.mulf %49, %25 : vector<16x128xf32>
    %52 = arith.addf %50, %51 : vector<16x128xf32>
    %c96_i32_18 = arith.constant 96 : i32
    %53 = tpu.dynamic_rotate %20 by %c96_i32_18 dim 1 : vector<16x128xf32>, i32 -> vector<16x128xf32>
    %c32_i32_19 = arith.constant 32 : i32
    %54 = tpu.dynamic_rotate %20 by %c32_i32_19 dim 1 : vector<16x128xf32>, i32 -> vector<16x128xf32>
    %cst_20 = arith.constant 0.000000e+00 : f32
    %55 = vector.broadcast %cst_20 : f32 to vector<16x128xf32>
    %56 = arith.subf %55, %53 : vector<16x128xf32>
    %57 = arith.select %44, %56, %54 : vector<16x128xi1>, vector<16x128xf32>
    %58 = arith.mulf %20, %23 : vector<16x128xf32>
    %59 = arith.mulf %57, %25 : vector<16x128xf32>
    %60 = arith.addf %58, %59 : vector<16x128xf32>
    %cst_21 = arith.constant 1.250000e-01 : f32
    %61 = vector.broadcast %cst_21 : f32 to vector<16x128xf32>
    %62 = arith.mulf %52, %61 : vector<16x128xf32>
    %c0_22 = arith.constant 0 : index
    %c0_23 = arith.constant 0 : index
    %c0_24 = arith.constant 0 : index
    %63 = vector.load %arg7[%c0_22, %c0_23, %c0_24] : memref<1x16x128xf32, #tpu.memory_space<vmem>>, vector<1x16x128xf32>
    %64 = vector.shape_cast %63 : vector<1x16x128xf32> to vector<16x128xf32>
    %65 = vector.shape_cast %62 : vector<16x128xf32> to vector<1x16x128xf32>
    tpu.vector_store %arg7[%c0_22, %c0_23, %c0_24], %65 {strides = array<i32>} : memref<1x16x128xf32, #tpu.memory_space<vmem>>, vector<1x16x128xf32>,
    %c0_25 = arith.constant 0 : index
    %c0_26 = arith.constant 0 : index
    %c0_27 = arith.constant 0 : index
    %66 = vector.load %arg8[%c0_25, %c0_26, %c0_27] : memref<1x16x128xf32, #tpu.memory_space<vmem>>, vector<1x16x128xf32>
    %67 = vector.shape_cast %66 : vector<1x16x128xf32> to vector<16x128xf32>
    %68 = vector.shape_cast %60 : vector<16x128xf32> to vector<1x16x128xf32>
    tpu.vector_store %arg8[%c0_25, %c0_26, %c0_27], %68 {strides = array<i32>} : memref<1x16x128xf32, #tpu.memory_space<vmem>>, vector<1x16x128xf32>,
    %c0_28 = arith.constant 0 : index
    %c0_29 = arith.constant 0 : index
    %c0_30 = arith.constant 0 : index
    %69 = vector.load %arg9[%c0_28, %c0_29, %c0_30] : memref<1x16x128xf32, #tpu.memory_space<vmem>>, vector<1x16x128xf32>
    %70 = vector.shape_cast %69 : vector<1x16x128xf32> to vector<16x128xf32>
    %71 = vector.shape_cast %21 : vector<16x128xf32> to vector<1x16x128xf32>
    tpu.vector_store %arg9[%c0_28, %c0_29, %c0_30], %71 {strides = array<i32>} : memref<1x16x128xf32, #tpu.memory_space<vmem>>, vector<1x16x128xf32>,
    return
  }
  func.func @transform_0(%arg0: i32, %arg1: i32) -> (i32, i32, i32) {
    %c0_i32 = arith.constant 0 : i32
    %c0_i32_0 = arith.constant 0 : i32
    return %arg0, %arg1, %c0_i32 : i32, i32, i32
  }
  func.func @transform_1(%arg0: i32, %arg1: i32) -> (i32, i32) {
    %c0_i32 = arith.constant 0 : i32
    %c0_i32_0 = arith.constant 0 : i32
    %c0_i32_1 = arith.constant 0 : i32
    return %c0_i32, %c0_i32_0 : i32, i32
  }
  func.func @transform_2(%arg0: i32, %arg1: i32) -> (i32, i32) {
    %c0_i32 = arith.constant 0 : i32
    %c0_i32_0 = arith.constant 0 : i32
    %c0_i32_1 = arith.constant 0 : i32
    return %c0_i32, %c0_i32_0 : i32, i32
  }
  func.func @transform_3(%arg0: i32, %arg1: i32) -> (i32, i32) {
    %c0_i32 = arith.constant 0 : i32
    %c0_i32_0 = arith.constant 0 : i32
    return %arg1, %c0_i32 : i32, i32
  }
  func.func @transform_4(%arg0: i32, %arg1: i32) -> (i32, i32) {
    %c0_i32 = arith.constant 0 : i32
    %c0_i32_0 = arith.constant 0 : i32
    return %arg1, %c0_i32 : i32, i32
  }
  func.func @transform_5(%arg0: i32, %arg1: i32) -> (i32, i32, i32) {
    %c0_i32 = arith.constant 0 : i32
    %c0_i32_0 = arith.constant 0 : i32
    return %arg0, %arg1, %c0_i32 : i32, i32, i32
  }
  func.func @transform_6(%arg0: i32, %arg1: i32) -> (i32, i32, i32) {
    %c0_i32 = arith.constant 0 : i32
    %c0_i32_0 = arith.constant 0 : i32
    return %arg0, %arg1, %c0_i32 : i32, i32, i32
  }
  func.func @transform_7(%arg0: i32, %arg1: i32) -> (i32, i32, i32) {
    %c0_i32 = arith.constant 0 : i32
    %c0_i32_0 = arith.constant 0 : i32
    return %arg0, %arg1, %c0_i32 : i32, i32, i32
  }
}

</mosaic_0001>

<llo_original>
// kernel: tpu_custom_call.1
$region0: #{tpu_custom_call.1}
  #allocation0 [shape = 'u32[]', space=smem, size = 0x4, offset = 0x4, fixed_abs, tag = 'smem constant byte address 0x4 - core index']
  #allocation1 [shape = 'u32[72,128]{1,0:T(1,128)}', space=vmem, size = 0x9000, scoped, tag = 'internal scratch']
  %s0 = inlined_call_operand.hbm [shape: f32[2,32,128], index: 0, kind: input, shape index: {}]
  %s1 = inlined_call_operand.hbm [shape: f32[1,128], index: 1, kind: input, shape index: {}]
  %s2 = inlined_call_operand.hbm [shape: f32[128,384], index: 2, kind: input, shape index: {}]
  %s3 = inlined_call_operand.hbm [shape: f32[32,64], index: 3, kind: input, shape index: {}]
  %s4 = inlined_call_operand.hbm [shape: f32[32,64], index: 4, kind: input, shape index: {}]
  %s5 = inlined_call_operand.hbm [shape: f32[2,32,128], index: 5, kind: output, shape index: {0}]
  %s6 = inlined_call_operand.hbm [shape: f32[2,32,128], index: 6, kind: output, shape index: {1}]
  %s7 = inlined_call_operand.hbm [shape: f32[2,32,128], index: 7, kind: output, shape index: {2}]
  %8 = xla_tuple %s5, %s6, %s7
  %s9 = sld [smem:[#allocation0]]
  $region89: #{tpu_custom_call.1} parent=0
    _
  %s11 = ssub.s32 1, %s9
  %s12 = scalar_select 0, %s11, %s9
  $region1: #{tpu_custom_call.1} parent=0
    #allocation2 [shape = 'u8[16384]{0}', space=vmem, size = 0x4000, scoped, tag = 'input window, operand 0']
    #allocation3 [shape = 's32[2]{0}', space=sflag, size = 0x8, scoped, tag = 'scoped memory for tpu_custom_call.1']
    #allocation4 [shape = 's32[2]{0}', space=sflag, size = 0x8, scoped, tag = 'scoped memory for tpu_custom_call.1']
    #allocation5 [shape = 'u8[512]{0}', space=vmem, size = 0x400, scoped, tag = 'input window, operand 1, single buffered']
    #allocation6 [shape = 's32[1]{0}', space=sflag, size = 0x4, scoped, tag = 'scoped memory for tpu_custom_call.1']
    #allocation7 [shape = 'u8[196608]{0}', space=vmem, size = 0x30000, scoped, tag = 'input window, operand 2, single buffered']
    #allocation8 [shape = 'u8[16384]{0}', space=vmem, size = 0x4000, scoped, tag = 'input window, operand 3']
    #allocation9 [shape = 's32[2]{0}', space=sflag, size = 0x8, scoped, tag = 'scoped memory for tpu_custom_call.1']
    #allocation10 [shape = 'u8[16384]{0}', space=vmem, size = 0x4000, scoped, tag = 'input window, operand 4']
    #allocation11 [shape = 'u8[16384]{0}', space=vmem, size = 0x4000, scoped, tag = 'output window, operand 0']
    #allocation12 [shape = 'u8[16384]{0}', space=vmem, size = 0x4000, scoped, tag = 'output window, operand 1']
    #allocation13 [shape = 's32[2]{0}', space=sflag, size = 0x8, scoped, tag = 'scoped memory for tpu_custom_call.1']
    #allocation14 [shape = 'u8[16384]{0}', space=vmem, size = 0x4000, scoped, tag = 'output window, operand 2']
    %13 = vsyncpa [#allocation3], 0
    %s14 = scalar_lea.sflag [#allocation3], 1
    %15 = vsyncpa %s14, 0
    %16 = vsyncpa [#allocation6], 0
    %17 = vsyncpa [#allocation9], 0
    %s18 = scalar_lea.sflag [#allocation9], 1
    %19 = vsyncpa %s18, 0
    %20 = vsyncpa [#allocation4], 0
    %s21 = scalar_lea.sflag [#allocation4], 1
    %22 = vsyncpa %s21, 0
    %23 = vsyncpa [#allocation13], 0
    %s24 = scalar_lea.sflag [#allocation13], 1
    %25 = vsyncpa %s24, 0
    loop: start=0, step=1, limit=6
    $region2: #{tpu_custom_call.1} parent=1 // loop_pre_header
      _
    $region3: #{tpu_custom_call.1} parent=1 // loop_header
      %s27 = sphi 0, %s31
      %p28 = scmp.ge.s32.totalorder %s27, 6
      %s34 = sphi 0, %s46
      %s35 = sphi 0, %s42
      %s36 = sphi 0, %s34
      %s37 = sphi 0, %s35
      %s38 = sphi 0, %s36
      %s39 = sphi 0, %s37
      %s51 = sphi 0, %s53
      %s54 = sphi 0, %s51
      %s55 = sphi 0, %s54
      %s71 = sphi 0, %s55
      %s75 = sphi 0, %s75
      %s77 = sphi 0, %s75
      %s78 = sphi 0, %s77
      %s92 = sphi 0, %s78
      %s96 = sphi 0, %s96
      %s98 = sphi 0, %s96
      %s99 = sphi 0, %s98
      %s113 = sphi 0, %s99
      %s119 = sphi 0, %s121
      %s122 = sphi 0, %s119
      %s123 = sphi 0, %s122
      %s139 = sphi 0, %s123
      %s145 = sphi 0, %s147
      %s148 = sphi 0, %s145
      %s149 = sphi 0, %s148
      %s165 = sphi 0, %s149
      %s173 = sphi 0, %s175
      %s176 = sphi 0, %s173
      %s177 = sphi 0, %s176
      %s193 = sphi 0, %s177
      %s201 = sphi 0, %s203
      %s204 = sphi 0, %s201
      %s205 = sphi 0, %s204
      %s221 = sphi 0, %s205
      %s229 = sphi 0, %s231
      %s232 = sphi 0, %s229
      %s233 = sphi 0, %s232
      %s249 = sphi 0, %s233
    $region4: #{tpu_custom_call.1} parent=1 // loop_header_branch
      %30 = sbr.rel (%p28) target = $region8
    $region5: #{tpu_custom_call.1} parent=1 // loop_body
      %s32 = ssub.s32 %s27, 1
      %s33 = ssub.s32 %s27, 2
      %s40 = sadd.s32 1, %s35
      %p41 = scmp.ge.s32.totalorder %s40, 2
      %s42 = scalar_select %p41, 0, %s40
      %s43 = sadd.s32 1, %s34
      %s44 = scalar_select %p41, %s43, %s34
      %p45 = scmp.ge.s32.totalorder %s44, 2
      %s46 = scalar_select %p45, 0, %s44
      %s47 = ssub.s32 %s34, %s46
      %s48 = ssub.s32 %s35, %s42
      %s49 = sor.u32 %s47, %s48
      %p50 = scmp.eq.s32.totalorder %s49, 0
      %s52 = sadd.s32 %s51, 1
      %s53 = scalar_select %p50, %s51, %s52
      %p56 = pneg %p50
      %p57 = scmp.eq.s32.totalorder %s27, 3
      %p58 = por %p56, %p57
      %p59 = scmp.ne.s32.totalorder %s51, %s54
      %p60 = scmp.eq.s32.totalorder %s27, 0
      %p61 = por %p59, %p60
      %p62 = scmp.ne.s32.totalorder %s51, %s54
      %p63 = scmp.eq.s32.totalorder %s32, 3
      %p64 = por %p62, %p63
      %p65 = scmp.ne.s32.totalorder %s54, %s55
      %p66 = scmp.eq.s32.totalorder %s32, 0
      %p67 = por %p65, %p66
      %p68 = scmp.ne.s32.totalorder %s54, %s55
      %p69 = scmp.eq.s32.totalorder %s33, 3
      %p70 = por %p68, %p69
      %p72 = scmp.ne.s32.totalorder %s55, %s71
      %p73 = scmp.eq.s32.totalorder %s33, 0
      %p74 = por %p72, %p73
      %s76 = sadd.s32 %s75, 1
      %p79 = scmp.eq.s32.totalorder %s27, 3
      %p80 = scmp.ne.s32.totalorder %s75, %s77
      %p81 = scmp.eq.s32.totalorder %s27, 0
      %p82 = por %p80, %p81
      %p83 = scmp.ne.s32.totalorder %s75, %s77
      %p84 = scmp.eq.s32.totalorder %s32, 3
      %p85 = por %p83, %p84
      %p86 = scmp.ne.s32.totalorder %s77, %s78
      %p87 = scmp.eq.s32.totalorder %s32, 0
      %p88 = por %p86, %p87
      %p89 = scmp.ne.s32.totalorder %s77, %s78
      %p90 = scmp.eq.s32.totalorder %s33, 3
      %p91 = por %p89, %p90
      %p93 = scmp.ne.s32.totalorder %s78, %s92
      %p94 = scmp.eq.s32.totalorder %s33, 0
      %p95 = por %p93, %p94
      %s97 = sadd.s32 %s96, 1
      %p100 = scmp.eq.s32.totalorder %s27, 3
      %p101 = scmp.ne.s32.totalorder %s96, %s98
      %p102 = scmp.eq.s32.totalorder %s27, 0
      %p103 = por %p101, %p102
      %p104 = scmp.ne.s32.totalorder %s96, %s98
      %p105 = scmp.eq.s32.totalorder %s32, 3
      %p106 = por %p104, %p105
      %p107 = scmp.ne.s32.totalorder %s98, %s99
      %p108 = scmp.eq.s32.totalorder %s32, 0
      %p109 = por %p107, %p108
      %p110 = scmp.ne.s32.totalorder %s98, %s99
      %p111 = scmp.eq.s32.totalorder %s33, 3
      %p112 = por %p110, %p111
      %p114 = scmp.ne.s32.totalorder %s99, %s113
      %p115 = scmp.eq.s32.totalorder %s33, 0
      %p116 = por %p114, %p115
      %s117 = ssub.s32 %s35, %s42
      %p118 = scmp.eq.s32.totalorder %s117, 0
      %s120 = sadd.s32 %s119, 1
      %s121 = scalar_select %p118, %s119, %s120
      %p124 = pneg %p118
      %p125 = scmp.eq.s32.totalorder %s27, 3
      %p126 = por %p124, %p125
      %p127 = scmp.ne.s32.totalorder %s119, %s122
      %p128 = scmp.eq.s32.totalorder %s27, 0
      %p129 = por %p127, %p128
      %p130 = scmp.ne.s32.totalorder %s119, %s122
      %p131 = scmp.eq.s32.totalorder %s32, 3
      %p132 = por %p130, %p131
      %p133 = scmp.ne.s32.totalorder %s122, %s123
      %p134 = scmp.eq.s32.totalorder %s32, 0
      %p135 = por %p133, %p134
      %p136 = scmp.ne.s32.totalorder %s122, %s123
      %p137 = scmp.eq.s32.totalorder %s33, 3
      %p138 = por %p136, %p137
      %p140 = scmp.ne.s32.totalorder %s123, %s139
      %p141 = scmp.eq.s32.totalorder %s33, 0
      %p142 = por %p140, %p141
      %s143 = ssub.s32 %s35, %s42
      %p144 = scmp.eq.s32.totalorder %s143, 0
      %s146 = sadd.s32 %s145, 1
      %s147 = scalar_select %p144, %s145, %s146
      %p150 = pneg %p144
      %p151 = scmp.eq.s32.totalorder %s27, 3
      %p152 = por %p150, %p151
      %p153 = scmp.ne.s32.totalorder %s145, %s148
      %p154 = scmp.eq.s32.totalorder %s27, 0
      %p155 = por %p153, %p154
      %p156 = scmp.ne.s32.totalorder %s145, %s148
      %p157 = scmp.eq.s32.totalorder %s32, 3
      %p158 = por %p156, %p157
      %p159 = scmp.ne.s32.totalorder %s148, %s149
      %p160 = scmp.eq.s32.totalorder %s32, 0
      %p161 = por %p159, %p160
      %p162 = scmp.ne.s32.totalorder %s148, %s149
      %p163 = scmp.eq.s32.totalorder %s33, 3
      %p164 = por %p162, %p163
      %p166 = scmp.ne.s32.totalorder %s149, %s165
      %p167 = scmp.eq.s32.totalorder %s33, 0
      %p168 = por %p166, %p167
      %s169 = ssub.s32 %s34, %s46
      %s170 = ssub.s32 %s35, %s42
      %s171 = sor.u32 %s169, %s170
      %p172 = scmp.eq.s32.totalorder %s171, 0
      %s174 = sadd.s32 %s173, 1
      %s175 = scalar_select %p172, %s173, %s174
      %p178 = pneg %p172
      %p179 = scmp.eq.s32.totalorder %s27, 3
      %p180 = por %p178, %p179
      %p181 = scmp.ne.s32.totalorder %s173, %s176
      %p182 = scmp.eq.s32.totalorder %s27, 0
      %p183 = por %p181, %p182
      %p184 = scmp.ne.s32.totalorder %s173, %s176
      %p185 = scmp.eq.s32.totalorder %s32, 3
      %p186 = por %p184, %p185
      %p187 = scmp.ne.s32.totalorder %s176, %s177
      %p188 = scmp.eq.s32.totalorder %s32, 0
      %p189 = por %p187, %p188
      %p190 = scmp.ne.s32.totalorder %s176, %s177
      %p191 = scmp.eq.s32.totalorder %s33, 3
      %p192 = por %p190, %p191
      %p194 = scmp.ne.s32.totalorder %s177, %s193
      %p195 = scmp.eq.s32.totalorder %s33, 0
      %p196 = por %p194, %p195
      %s197 = ssub.s32 %s34, %s46
      %s198 = ssub.s32 %s35, %s42
      %s199 = sor.u32 %s197, %s198
      %p200 = scmp.eq.s32.totalorder %s199, 0
      %s202 = sadd.s32 %s201, 1
      %s203 = scalar_select %p200, %s201, %s202
      %p206 = pneg %p200
      %p207 = scmp.eq.s32.totalorder %s27, 3
      %p208 = por %p206, %p207
      %p209 = scmp.ne.s32.totalorder %s201, %s204
      %p210 = scmp.eq.s32.totalorder %s27, 0
      %p211 = por %p209, %p210
      %p212 = scmp.ne.s32.totalorder %s201, %s204
      %p213 = scmp.eq.s32.totalorder %s32, 3
      %p214 = por %p212, %p213
      %p215 = scmp.ne.s32.totalorder %s204, %s205
      %p216 = scmp.eq.s32.totalorder %s32, 0
      %p217 = por %p215, %p216
      %p218 = scmp.ne.s32.totalorder %s204, %s205
      %p219 = scmp.eq.s32.totalorder %s33, 3
      %p220 = por %p218, %p219
      %p222 = scmp.ne.s32.totalorder %s205, %s221
      %p223 = scmp.eq.s32.totalorder %s33, 0
      %p224 = por %p222, %p223
      %s225 = ssub.s32 %s34, %s46
      %s226 = ssub.s32 %s35, %s42
      %s227 = sor.u32 %s225, %s226
      %p228 = scmp.eq.s32.totalorder %s227, 0
      %s230 = sadd.s32 %s229, 1
      %s231 = scalar_select %p228, %s229, %s230
      %p234 = pneg %p228
      %p235 = scmp.eq.s32.totalorder %s27, 3
      %p236 = por %p234, %p235
      %p237 = scmp.ne.s32.totalorder %s229, %s232
      %p238 = scmp.eq.s32.totalorder %s27, 0
      %p239 = por %p237, %p238
      %p240 = scmp.ne.s32.totalorder %s229, %s232
      %p241 = scmp.eq.s32.totalorder %s32, 3
      %p242 = por %p240, %p241
      %p243 = scmp.ne.s32.totalorder %s232, %s233
      %p244 = scmp.eq.s32.totalorder %s32, 0
      %p245 = por %p243, %p244
      %p246 = scmp.ne.s32.totalorder %s232, %s233
      %p247 = scmp.eq.s32.totalorder %s33, 3
      %p248 = por %p246, %p247
      %p250 = scmp.ne.s32.totalorder %s233, %s249
      %p251 = scmp.eq.s32.totalorder %s33, 0
      %p252 = por %p250, %p251
      %p253 = scmp.le.s32.totalorder 1, %s27
      %p254 = scmp.lt.s32.totalorder %s27, 5
      %p255 = pnand %p253, %p254
      %p256 = pneg %p255
      // Predicated region
      $region9: #{tpu_custom_call.1} parent=5 // pred_check
        _
      $region10: #{tpu_custom_call.1} parent=5 // pred_check_branch
        %258 = sbr.rel (%p255) target = $region12
      $region11: #{tpu_custom_call.1} parent=5 // pred_region
        %s259 = ssub.s32 %s27, 1
        // Predicated region
        $region13: #{tpu_custom_call.1} parent=11 // pred_check
          %p260 = pneg %p88
        $region14: #{tpu_custom_call.1} parent=11 // pred_check_branch
          %262 = sbr.rel (%p260) target = $region16
        $region15: #{tpu_custom_call.1} parent=11 // pred_region
          %264 = vsyncadd [#allocation6], 0
          %s266 = sshll.u32 %s1, 4
          %s267 = int_to_ptr.hbm [resolvable:$true] %s266
          %s268 = sshll.u32 [#allocation5], 4
          %s269 = int_to_ptr.vmem [resolvable:$true] %s268
          %271 = dma.hbm_to_vmem [thread:$0]  %s267, 16, %s269, [#allocation6]
        $region16: #{tpu_custom_call.1} parent=11 // pred_fallthru
          _
        // Predicated region
        $region17: #{tpu_custom_call.1} parent=11 // pred_check
          %p272 = pneg %p109
        $region18: #{tpu_custom_call.1} parent=11 // pred_check_branch
          %274 = sbr.rel (%p272) target = $region20
        $region19: #{tpu_custom_call.1} parent=11 // pred_region
          %276 = vsyncadd [#allocation6], 0
          %s277 = sshll.u32 %s2, 4
          %s278 = int_to_ptr.hbm [resolvable:$true] %s277
          %s279 = sshll.u32 [#allocation7], 4
          %s280 = int_to_ptr.vmem [resolvable:$true] %s279
          %285 = dma.hbm_to_vmem [thread:$0]  %s278, 6144, %s280, [#allocation6], 384, 384, 24
        $region20: #{tpu_custom_call.1} parent=11 // pred_fallthru
          _
      $region12: #{tpu_custom_call.1} parent=5 // pred_fallthru
        _
      %p286 = scmp.lt.s32.totalorder %s27, 4
      // Predicated region
      $region21: #{tpu_custom_call.1} parent=5 // pred_check
        %p287 = pneg %p286
      $region22: #{tpu_custom_call.1} parent=5 // pred_check_branch
        %289 = sbr.rel (%p287) target = $region24
      $region23: #{tpu_custom_call.1} parent=5 // pred_region
        // Predicated region
        $region25: #{tpu_custom_call.1} parent=23 // pred_check
          %p290 = pneg %p61
        $region26: #{tpu_custom_call.1} parent=23 // pred_check_branch
          %292 = sbr.rel (%p290) target = $region28
        $region27: #{tpu_custom_call.1} parent=23 // pred_region
          %s293 = sand.u32 %s51, 1
          %s294 = scalar_lea.sflag [#allocation3], %s293
          %s295 = sand.u32 %s51, 1
          %s296 = smul.addr %s295, 16
          %s297 = scalar_lea.vmem [#allocation2], %s296
          %s298 = smul.u32 2, %s35
          %300 = vsyncadd %s294, 0
          %s301 = smul.addr %s34, 4
          %s302 = sadd.s32 %s298, %s301
          %s303 = smul.addr %s302, 8
          %s304 = scalar_lea.hbm %s0, %s303
          %s305 = sshll.u32 %s304, 4
          %s306 = int_to_ptr.hbm [resolvable:$true] %s305
          %s307 = sshll.u32 %s297, 4
          %s308 = int_to_ptr.vmem [resolvable:$true] %s307
          %313 = dma.hbm_to_vmem [thread:$0]  %s306, 256, %s308, %s294, 128, 128, 8
        $region28: #{tpu_custom_call.1} parent=23 // pred_fallthru
          _
        // Predicated region
        $region29: #{tpu_custom_call.1} parent=23 // pred_check
          %p314 = pneg %p129
        $region30: #{tpu_custom_call.1} parent=23 // pred_check_branch
          %316 = sbr.rel (%p314) target = $region32
        $region31: #{tpu_custom_call.1} parent=23 // pred_region
          %s317 = sand.u32 %s27, 1
          %s318 = scalar_lea.sflag [#allocation9], %s317
          %s319 = sand.u32 %s119, 1
          %s320 = smul.addr %s319, 16
          %s321 = scalar_lea.vmem [#allocation8], %s320
          %s322 = smul.u32 2, %s35
          %324 = vsyncadd %s318, 0
          %s325 = smul.addr %s322, 8
          %s326 = scalar_lea.hbm %s3, %s325
          %s327 = sshll.u32 %s326, 4
          %s328 = int_to_ptr.hbm [resolvable:$true] %s327
          %s329 = sshll.u32 %s321, 4
          %s330 = int_to_ptr.vmem [resolvable:$true] %s329
          %335 = dma.hbm_to_vmem [thread:$0]  %s328, 256, %s330, %s318, 128, 128, 8
        $region32: #{tpu_custom_call.1} parent=23 // pred_fallthru
          _
        // Predicated region
        $region33: #{tpu_custom_call.1} parent=23 // pred_check
          %p336 = pneg %p155
        $region34: #{tpu_custom_call.1} parent=23 // pred_check_branch
          %338 = sbr.rel (%p336) target = $region36
        $region35: #{tpu_custom_call.1} parent=23 // pred_region
          %s339 = sand.u32 %s27, 1
          %s340 = scalar_lea.sflag [#allocation9], %s339
          %s341 = sand.u32 %s145, 1
          %s342 = smul.addr %s341, 16
          %s343 = scalar_lea.vmem [#allocation10], %s342
          %s344 = smul.u32 2, %s35
          %346 = vsyncadd %s340, 0
          %s347 = smul.addr %s344, 8
          %s348 = scalar_lea.hbm %s4, %s347
          %s349 = sshll.u32 %s348, 4
          %s350 = int_to_ptr.hbm [resolvable:$true] %s349
          %s351 = sshll.u32 %s343, 4
          %s352 = int_to_ptr.vmem [resolvable:$true] %s351
          %357 = dma.hbm_to_vmem [thread:$0]  %s350, 256, %s352, %s340, 128, 128, 8
        $region36: #{tpu_custom_call.1} parent=23 // pred_fallthru
          _
      $region24: #{tpu_custom_call.1} parent=5 // pred_fallthru
        _
      %p358 = scmp.le.s32.totalorder 1, %s27
      %p359 = scmp.lt.s32.totalorder %s27, 5
      %p360 = pnand %p358, %p359
      %p361 = pneg %p360
      // Predicated region
      $region37: #{tpu_custom_call.1} parent=5 // pred_check
        _
      $region38: #{tpu_custom_call.1} parent=5 // pred_check_branch
        %363 = sbr.rel (%p360) target = $region40
      $region39: #{tpu_custom_call.1} parent=5 // pred_region
        %s364 = ssub.s32 %s27, 1
        %s365 = sand.u32 %s54, 1
        %s366 = scalar_lea.sflag [#allocation3], %s365
        %s367 = sand.u32 %s54, 1
        %s368 = smul.addr %s367, 16
        %s369 = scalar_lea.vmem [#allocation2], %s368
        // Predicated region
        $region41: #{tpu_custom_call.1} parent=39 // pred_check
          %p370 = pneg %p67
        $region42: #{tpu_custom_call.1} parent=39 // pred_check_branch
          %372 = sbr.rel (%p370) target = $region44
        $region43: #{tpu_custom_call.1} parent=39 // pred_region
          %374 = dma.done %s366, 256
        $region44: #{tpu_custom_call.1} parent=39 // pred_fallthru
          _
        // Predicated region
        $region45: #{tpu_custom_call.1} parent=39 // pred_check
          %p375 = pneg %p88
        $region46: #{tpu_custom_call.1} parent=39 // pred_check_branch
          %377 = sbr.rel (%p375) target = $region48
        $region47: #{tpu_custom_call.1} parent=39 // pred_region
          %379 = dma.done [#allocation6], 16
        $region48: #{tpu_custom_call.1} parent=39 // pred_fallthru
          _
        // Predicated region
        $region49: #{tpu_custom_call.1} parent=39 // pred_check
          %p380 = pneg %p109
        $region50: #{tpu_custom_call.1} parent=39 // pred_check_branch
          %382 = sbr.rel (%p380) target = $region52
        $region51: #{tpu_custom_call.1} parent=39 // pred_region
          %384 = dma.done [#allocation6], 6144
        $region52: #{tpu_custom_call.1} parent=39 // pred_fallthru
          _
        %s385 = sand.u32 %s32, 1
        %s386 = scalar_lea.sflag [#allocation9], %s385
        %s387 = sand.u32 %s122, 1
        %s388 = smul.addr %s387, 16
        %s389 = scalar_lea.vmem [#allocation8], %s388
        // Predicated region
        $region53: #{tpu_custom_call.1} parent=39 // pred_check
          %p390 = pneg %p135
        $region54: #{tpu_custom_call.1} parent=39 // pred_check_branch
          %392 = sbr.rel (%p390) target = $region56
        $region55: #{tpu_custom_call.1} parent=39 // pred_region
          %394 = dma.done %s386, 256
        $region56: #{tpu_custom_call.1} parent=39 // pred_fallthru
          _
        %s395 = sand.u32 %s32, 1
        %s396 = scalar_lea.sflag [#allocation9], %s395
        %s397 = sand.u32 %s148, 1
        %s398 = smul.addr %s397, 16
        %s399 = scalar_lea.vmem [#allocation10], %s398
        // Predicated region
        $region57: #{tpu_custom_call.1} parent=39 // pred_check
          %p400 = pneg %p161
        $region58: #{tpu_custom_call.1} parent=39 // pred_check_branch
          %402 = sbr.rel (%p400) target = $region60
        $region59: #{tpu_custom_call.1} parent=39 // pred_region
          %404 = dma.done %s396, 256
        $region60: #{tpu_custom_call.1} parent=39 // pred_fallthru
          _
        %s405 = sand.u32 %s54, 1
        %s406 = scalar_lea.sflag [#allocation3], %s405
        %s407 = sand.u32 %s54, 1
        %s408 = smul.addr %s407, 16
        %s409 = scalar_lea.vmem [#allocation2], %s408
        %p410 = pneg %p67
        %p411 = pneg %p64
        %p412 = pneg %p88
        %p413 = pneg %p85
        %p414 = pneg %p109
        %p415 = pneg %p106
        %s416 = sand.u32 %s32, 1
        %s417 = scalar_lea.sflag [#allocation9], %s416
        %s418 = sand.u32 %s122, 1
        %s419 = smul.addr %s418, 16
        %s420 = scalar_lea.vmem [#allocation8], %s419
        %p421 = pneg %p135
        %p422 = pneg %p132
        %s423 = sand.u32 %s32, 1
        %s424 = scalar_lea.sflag [#allocation9], %s423
        %s425 = sand.u32 %s148, 1
        %s426 = smul.addr %s425, 16
        %s427 = scalar_lea.vmem [#allocation10], %s426
        %p428 = pneg %p161
        %p429 = pneg %p158
        %p430 = pneg %p189
        %p431 = pneg %p186
        %s432 = sand.u32 %s176, 1
        %s433 = scalar_lea.sflag [#allocation4], %s432
        %s434 = sand.u32 %s176, 1
        %s435 = smul.addr %s434, 16
        %s436 = scalar_lea.vmem [#allocation11], %s435
        %p437 = pneg %p217
        %p438 = pneg %p214
        %s439 = sand.u32 %s32, 1
        %s440 = scalar_lea.sflag [#allocation13], %s439
        %s441 = sand.u32 %s204, 1
        %s442 = smul.addr %s441, 16
        %s443 = scalar_lea.vmem [#allocation12], %s442
        %p444 = pneg %p245
        %p445 = pneg %p242
        %s446 = sand.u32 %s32, 1
        %s447 = scalar_lea.sflag [#allocation13], %s446
        %s448 = sand.u32 %s232, 1
        %s449 = smul.addr %s448, 16
        %s450 = scalar_lea.vmem [#allocation14], %s449
        %s451 = smul.u32 2, %s37
        %s452 = smul.u32 2, %s37
        %s453 = smul.u32 2, %s37
        %s454 = smul.u32 2, %s37
        %s455 = smul.u32 2, %s37
        %s456 = smul.u32 2, %s37
        %v457 = vld [vmem:[%s369] sm:$0xff]
        %v458 = vld [vmem:[%s369 + $0x8] sm:$0xff]
        %v459 = vmul.f32 %v457, %v457
        %v460 = vmul.f32 %v458, %v458
        %461 = vadd.xlane.f32.xlu0 %v459
        %v462 = vpop.xlane.xlu0 %461
        %463 = vadd.xlane.f32.xlu0 %v460
        %v464 = vpop.xlane.xlu0 %463
        %v465 = vrsqrt.pop %v462
        %v466 = vmul.f32 %v465, %v462
        %v467 = vmul.f32 %v466, %v465
        %v468 = vmul.f32 0.5, %v467
        %v469 = vsub.f32 1.5, %v468
        %v470 = vmul.f32 %v465, %v469
        %v471 = vmul.f32 %v462, %v470
        %vm472 = vcmp.eq.f32.partialorder %v462, inf
        %v473 = vsel %vm472, %v462, %v471
        %vm474 = vcmp.eq.f32.partialorder %v462, 0.0
        %v475 = vand.u32 %v462, 2147483648
        %v476 = vsel %vm474, %v475, %v473
        %v477 = vrsqrt.pop %v464
        %v478 = vmul.f32 %v477, %v464
        %v479 = vmul.f32 %v478, %v477
        %v480 = vmul.f32 0.5, %v479
        %v481 = vsub.f32 1.5, %v480
        %v482 = vmul.f32 %v477, %v481
        %v483 = vmul.f32 %v464, %v482
        %vm484 = vcmp.eq.f32.partialorder %v464, inf
        %v485 = vsel %vm484, %v464, %v483
        %vm486 = vcmp.eq.f32.partialorder %v464, 0.0
        %v487 = vand.u32 %v464, 2147483648
        %v488 = vsel %vm486, %v487, %v485
        %v489 = vmax.f32 %v476, 1e-12
        %v490 = vmax.f32 %v488, 1e-12
        %v491 = vrcp.pop %v489
        %v492 = vmul.f32 %v489, %v491
        %v493 = vsub.f32 1.0, %v492
        %v494 = vmul.f32 %v491, %v493
        %v495 = vadd.f32 %v491, %v494
        %vm496 = vweird.f32 %v489
        %vm497 = vweird.f32 %v491
        %vm498 = vmor %vm496, %vm497
        %v499 = vsel %vm498, %v491, %v495
        %v500 = vand.u32 2147483647, %v489
        %vm501 = vcmp.eq.f32.partialorder %v500, 8.507059e+37
        %v502 = vand.u32 %v489, 2147483648
        %v503 = vor.u32 1.1754944e-38, %v502
        %v504 = vsel %vm501, %v503, %v499
        %v505 = vmul.f32 %v457, %v504
        %v506 = vrcp.pop %v490
        %v507 = vmul.f32 %v490, %v506
        %v508 = vsub.f32 1.0, %v507
        %v509 = vmul.f32 %v506, %v508
        %v510 = vadd.f32 %v506, %v509
        %vm511 = vweird.f32 %v490
        %vm512 = vweird.f32 %v506
        %vm513 = vmor %vm511, %vm512
        %v514 = vsel %vm513, %v506, %v510
        %v515 = vand.u32 2147483647, %v490
        %vm516 = vcmp.eq.f32.partialorder %v515, 8.507059e+37
        %v517 = vand.u32 %v490, 2147483648
        %v518 = vor.u32 1.1754944e-38, %v517
        %v519 = vsel %vm516, %v518, %v514
        %v520 = vmul.f32 %v458, %v519
        %v521 = vmul.f32 %v505, 11.313708
        %v522 = vmul.f32 %v520, 11.313708
        %v523 = vld [vmem:[#allocation5] sm:$0x1]
        %v525 = vperm.slane %v523, 0
        %v527 = vmul.f32 %v521, %v525
        %v528 = vmul.f32 %v522, %v525
        %v529 = vld [vmem:[#allocation7] sm:$0xff]
        %v530 = vld [vmem:[#allocation7 + $0x8] sm:$0xff]
        %v531 = vld [vmem:[#allocation7 + $0x10] sm:$0xff]
        %v532 = vld [vmem:[#allocation7 + $0x18] sm:$0xff]
        %v533 = vld [vmem:[#allocation7 + $0x20] sm:$0xff]
        %v534 = vld [vmem:[#allocation7 + $0x28] sm:$0xff]
        %v535 = vld [vmem:[#allocation7 + $0x30] sm:$0xff]
        %v536 = vld [vmem:[#allocation7 + $0x38] sm:$0xff]
        %v537 = vld [vmem:[#allocation7 + $0x40] sm:$0xff]
        %v538 = vld [vmem:[#allocation7 + $0x48] sm:$0xff]
        %v539 = vld [vmem:[#allocation7 + $0x50] sm:$0xff]
        %v540 = vld [vmem:[#allocation7 + $0x58] sm:$0xff]
        %v541 = vld [vmem:[#allocation7 + $0x60] sm:$0xff]
        %v542 = vld [vmem:[#allocation7 + $0x68] sm:$0xff]
        %v543 = vld [vmem:[#allocation7 + $0x70] sm:$0xff]
        %v544 = vld [vmem:[#allocation7 + $0x78] sm:$0xff]
        %v545 = vld [vmem:[#allocation7 + $0x80] sm:$0xff]
        %v546 = vld [vmem:[#allocation7 + $0x88] sm:$0xff]
        %v547 = vld [vmem:[#allocation7 + $0x90] sm:$0xff]
        %v548 = vld [vmem:[#allocation7 + $0x98] sm:$0xff]
        %v549 = vld [vmem:[#allocation7 + $0xa0] sm:$0xff]
        %v550 = vld [vmem:[#allocation7 + $0xa8] sm:$0xff]
        %v551 = vld [vmem:[#allocation7 + $0xb0] sm:$0xff]
        %v552 = vld [vmem:[#allocation7 + $0xb8] sm:$0xff]
        %v553 = vld [vmem:[#allocation7 + $0xc0] sm:$0xff]
        %v554 = vld [vmem:[#allocation7 + $0xc8] sm:$0xff]
        %v555 = vld [vmem:[#allocation7 + $0xd0] sm:$0xff]
        %v556 = vld [vmem:[#allocation7 + $0xd8] sm:$0xff]
        %v557 = vld [vmem:[#allocation7 + $0xe0] sm:$0xff]
        %v558 = vld [vmem:[#allocation7 + $0xe8] sm:$0xff]
        %v559 = vld [vmem:[#allocation7 + $0xf0] sm:$0xff]
        %v560 = vld [vmem:[#allocation7 + $0xf8] sm:$0xff]
        %v561 = vld [vmem:[#allocation7 + $0x100] sm:$0xff]
        %v562 = vld [vmem:[#allocation7 + $0x108] sm:$0xff]
        %v563 = vld [vmem:[#allocation7 + $0x110] sm:$0xff]
        %v564 = vld [vmem:[#allocation7 + $0x118] sm:$0xff]
        %v565 = vld [vmem:[#allocation7 + $0x120] sm:$0xff]
        %v566 = vld [vmem:[#allocation7 + $0x128] sm:$0xff]
        %v567 = vld [vmem:[#allocation7 + $0x130] sm:$0xff]
        %v568 = vld [vmem:[#allocation7 + $0x138] sm:$0xff]
        %v569 = vld [vmem:[#allocation7 + $0x140] sm:$0xff]
        %v570 = vld [vmem:[#allocation7 + $0x148] sm:$0xff]
        %v571 = vld [vmem:[#allocation7 + $0x150] sm:$0xff]
        %v572 = vld [vmem:[#allocation7 + $0x158] sm:$0xff]
        %v573 = vld [vmem:[#allocation7 + $0x160] sm:$0xff]
        %v574 = vld [vmem:[#allocation7 + $0x168] sm:$0xff]
        %v575 = vld [vmem:[#allocation7 + $0x170] sm:$0xff]
        %v576 = vld [vmem:[#allocation7 + $0x178] sm:$0xff]
        %577 = vmatpush.msra.mxu0 %v574
        %578 = vmatpush.msra.mxu0 %v571
        %579 = vmatpush.msra.mxu0 %v568
        %580 = vmatpush.msra.mxu0 %v565
        %581 = vmatpush.msra.mxu0 %v562
        %582 = vmatpush.msra.mxu0 %v559
        %583 = vmatpush.msra.mxu0 %v556
        %584 = vmatpush.msra.mxu0 %v553
        %585 = vmatpush.msra.mxu0 %v550
        %586 = vmatpush.msra.mxu0 %v547
        %587 = vmatpush.msra.mxu0 %v544
        %588 = vmatpush.msra.mxu0 %v541
        %589 = vmatpush.msra.mxu0 %v538
        %590 = vmatpush.msra.mxu0 %v535
        %591 = vmatpush.msra.mxu0 %v532
        %592 = vmatpush.msra.mxu0 %v529
        %593 = vmatmul.f32.gmra.mxu0 %v527
        %v594 = vpop.f32.mrf.mxu0
        %v595 = vadd.f32 0.0, %v594
        %596 = vmatmul.f32.gmra.mxu0 %v528
        %v597 = vpop.f32.mrf.mxu0
        %v598 = vadd.f32 0.0, %v597
        %599 = vdwg.mxu0
        %600 = vmatpush.msra.mxu0 %v575
        %601 = vmatpush.msra.mxu0 %v572
        %602 = vmatpush.msra.mxu0 %v569
        %603 = vmatpush.msra.mxu0 %v566
        %604 = vmatpush.msra.mxu0 %v563
        %605 = vmatpush.msra.mxu0 %v560
        %606 = vmatpush.msra.mxu0 %v557
        %607 = vmatpush.msra.mxu0 %v554
        %608 = vmatpush.msra.mxu0 %v551
        %609 = vmatpush.msra.mxu0 %v548
        %610 = vmatpush.msra.mxu0 %v545
        %611 = vmatpush.msra.mxu0 %v542
        %612 = vmatpush.msra.mxu0 %v539
        %613 = vmatpush.msra.mxu0 %v536
        %614 = vmatpush.msra.mxu0 %v533
        %615 = vmatpush.msra.mxu0 %v530
        %616 = vmatmul.f32.gmra.mxu0 %v527
        %v617 = vpop.f32.mrf.mxu0
        %v618 = vadd.f32 0.0, %v617
        %619 = vmatmul.f32.gmra.mxu0 %v528
        %v620 = vpop.f32.mrf.mxu0
        %v621 = vadd.f32 0.0, %v620
        %622 = vdwg.mxu0
        %623 = vmatpush.msra.mxu0 %v576
        %624 = vmatpush.msra.mxu0 %v573
        %625 = vmatpush.msra.mxu0 %v570
        %626 = vmatpush.msra.mxu0 %v567
        %627 = vmatpush.msra.mxu0 %v564
        %628 = vmatpush.msra.mxu0 %v561
        %629 = vmatpush.msra.mxu0 %v558
        %630 = vmatpush.msra.mxu0 %v555
        %631 = vmatpush.msra.mxu0 %v552
        %632 = vmatpush.msra.mxu0 %v549
        %633 = vmatpush.msra.mxu0 %v546
        %634 = vmatpush.msra.mxu0 %v543
        %635 = vmatpush.msra.mxu0 %v540
        %636 = vmatpush.msra.mxu0 %v537
        %637 = vmatpush.msra.mxu0 %v534
        %638 = vmatpush.msra.mxu0 %v531
        %639 = vmatmul.f32.gmra.mxu0 %v527
        %v640 = vpop.f32.mrf.mxu0
        %v641 = vadd.f32 0.0, %v640
        %642 = vmatmul.f32.gmra.mxu0 %v528
        %v643 = vpop.f32.mrf.mxu0
        %v644 = vadd.f32 0.0, %v643
        %645 = vdwg.mxu0
        %v646 = vld [vmem:[%s389] sm:$0xff]
        %v647 = vld [vmem:[%s389 + $0x8] sm:$0xff]
        %650 = vrot.lane.b32.xlu0 %v646, 64
        %v651 = vpop.permute.xlu0 %650
        %652 = vrot.lane.b32.xlu0 %v647, 64
        %v653 = vpop.permute.xlu0 %652
        %vm656 = vcmask 523264
        %v657 = vsel %vm656, %v646, %v651
        %v658 = vsel %vm656, %v647, %v653
        %v659 = vld [vmem:[%s399] sm:$0xff]
        %v660 = vld [vmem:[%s399 + $0x8] sm:$0xff]
        %663 = vrot.lane.b32.xlu0 %v659, 64
        %v664 = vpop.permute.xlu0 %663
        %665 = vrot.lane.b32.xlu0 %v660, 64
        %v666 = vpop.permute.xlu0 %665
        %v669 = vsel %vm656, %v659, %v664
        %v670 = vsel %vm656, %v660, %v666
        %v671 = vlaneseq
        %v672 = vand.u32 %v671, 127
        %vm673 = vcmp.lt.s32.totalorder %v672, 0
        %v674 = vsub.s32 0, %v672
        %v675 = vsel %vm673, %v674, %v672
        %v676 = vshrl.u32 %v675, 6
        %v677 = vand.u32 %v675, 63
        %v678 = vsub.s32 0, %v677
        %v679 = vsel %vm673, %v678, %v677
        %vm680 = vcmp.ne.s32.totalorder %v679, 0
        %vm681 = vcmp.lt.s32.totalorder %v679, 0
        %vm682 = vmand %vm681, %vm680
        %v683 = vadd.s32 %v679, 64
        %v684 = vsel %vm682, %v683, %v679
        %vm685 = vcmp.lt.s32.totalorder %v684, 32
        %686 = vrot.lane.b32.xlu0 %v595, 96
        %v687 = vpop.permute.xlu0 %686
        %688 = vrot.lane.b32.xlu0 %v598, 96
        %v689 = vpop.permute.xlu0 %688
        %690 = vrot.lane.b32.xlu0 %v595, 32
        %v691 = vpop.permute.xlu0 %690
        %692 = vrot.lane.b32.xlu0 %v598, 32
        %v693 = vpop.permute.xlu0 %692
        %v694 = vsub.f32 0.0, %v687
        %v695 = vsub.f32 0.0, %v689
        %v696 = vsel %vm685, %v694, %v691
        %v697 = vsel %vm685, %v695, %v693
        %v698 = vmul.f32 %v595, %v657
        %v699 = vmul.f32 %v598, %v658
        %v700 = vmul.f32 %v696, %v669
        %v701 = vmul.f32 %v697, %v670
        %v702 = vadd.f32 %v698, %v700
        %v703 = vadd.f32 %v699, %v701
        %704 = vrot.lane.b32.xlu0 %v618, 96
        %v705 = vpop.permute.xlu0 %704
        %706 = vrot.lane.b32.xlu0 %v621, 96
        %v707 = vpop.permute.xlu0 %706
        %708 = vrot.lane.b32.xlu0 %v618, 32
        %v709 = vpop.permute.xlu0 %708
        %710 = vrot.lane.b32.xlu0 %v621, 32
        %v711 = vpop.permute.xlu0 %710
        %v712 = vsub.f32 0.0, %v705
        %v713 = vsub.f32 0.0, %v707
        %v714 = vsel %vm685, %v712, %v709
        %v715 = vsel %vm685, %v713, %v711
        %v716 = vmul.f32 %v618, %v657
        %v717 = vmul.f32 %v621, %v658
        %v718 = vmul.f32 %v714, %v669
        %v719 = vmul.f32 %v715, %v670
        %v720 = vadd.f32 %v716, %v718
        %v721 = vadd.f32 %v717, %v719
        %v722 = vmul.f32 %v702, 0.125
        %v723 = vmul.f32 %v703, 0.125
        %724 = vst [vmem:[%s436] sm:$0xff] %v722
        %725 = vst [vmem:[%s436 + $0x8] sm:$0xff] %v723
        %726 = vst [vmem:[%s443] sm:$0xff] %v720
        %727 = vst [vmem:[%s443 + $0x8] sm:$0xff] %v721
        %728 = vst [vmem:[%s450] sm:$0xff] %v641
        %729 = vst [vmem:[%s450 + $0x8] sm:$0xff] %v644
        %s730 = sand.u32 %s176, 1
        %s731 = scalar_lea.sflag [#allocation4], %s730
        %s732 = sand.u32 %s176, 1
        %s733 = smul.addr %s732, 16
        %s734 = scalar_lea.vmem [#allocation11], %s733
        %s735 = sand.u32 %s32, 1
        %s736 = scalar_lea.sflag [#allocation13], %s735
        %s737 = sand.u32 %s204, 1
        %s738 = smul.addr %s737, 16
        %s739 = scalar_lea.vmem [#allocation12], %s738
        %s740 = sand.u32 %s32, 1
        %s741 = scalar_lea.sflag [#allocation13], %s740
        %s742 = sand.u32 %s232, 1
        %s743 = smul.addr %s742, 16
        %s744 = scalar_lea.vmem [#allocation14], %s743
        // Predicated region
        $region61: #{tpu_custom_call.1} parent=39 // pred_check
          %p745 = pneg %p186
        $region62: #{tpu_custom_call.1} parent=39 // pred_check_branch
          %747 = sbr.rel (%p745) target = $region64
        $region63: #{tpu_custom_call.1} parent=39 // pred_region
          %s748 = smul.u32 2, %s37
          %750 = vsyncadd %s731, 0
          %s751 = smul.addr %s36, 4
          %s752 = sadd.s32 %s748, %s751
          %s753 = smul.addr %s752, 8
          %s754 = scalar_lea.hbm %s5, %s753
          %s755 = sshll.u32 %s734, 4
          %s756 = int_to_ptr.vmem [resolvable:$true] %s755
          %s757 = sshll.u32 %s754, 4
          %s758 = int_to_ptr.hbm [resolvable:$true] %s757
          %763 = dma.vmem_to_hbm [thread:$0]  %s756, 256, %s758, %s731, 128, 128, 8
        $region64: #{tpu_custom_call.1} parent=39 // pred_fallthru
          _
        // Predicated region
        $region65: #{tpu_custom_call.1} parent=39 // pred_check
          %p764 = pneg %p214
        $region66: #{tpu_custom_call.1} parent=39 // pred_check_branch
          %766 = sbr.rel (%p764) target = $region68
        $region67: #{tpu_custom_call.1} parent=39 // pred_region
          %s767 = smul.u32 2, %s37
          %769 = vsyncadd %s736, 0
          %s770 = smul.addr %s36, 4
          %s771 = sadd.s32 %s767, %s770
          %s772 = smul.addr %s771, 8
          %s773 = scalar_lea.hbm %s6, %s772
          %s774 = sshll.u32 %s739, 4
          %s775 = int_to_ptr.vmem [resolvable:$true] %s774
          %s776 = sshll.u32 %s773, 4
          %s777 = int_to_ptr.hbm [resolvable:$true] %s776
          %782 = dma.vmem_to_hbm [thread:$0]  %s775, 256, %s777, %s736, 128, 128, 8
        $region68: #{tpu_custom_call.1} parent=39 // pred_fallthru
          _
        // Predicated region
        $region69: #{tpu_custom_call.1} parent=39 // pred_check
          %p783 = pneg %p242
        $region70: #{tpu_custom_call.1} parent=39 // pred_check_branch
          %785 = sbr.rel (%p783) target = $region72
        $region71: #{tpu_custom_call.1} parent=39 // pred_region
          %s786 = smul.u32 2, %s37
          %788 = vsyncadd %s741, 0
          %s789 = smul.addr %s36, 4
          %s790 = sadd.s32 %s786, %s789
          %s791 = smul.addr %s790, 8
          %s792 = scalar_lea.hbm %s7, %s791
          %s793 = sshll.u32 %s744, 4
          %s794 = int_to_ptr.vmem [resolvable:$true] %s793
          %s795 = sshll.u32 %s792, 4
          %s796 = int_to_ptr.hbm [resolvable:$true] %s795
          %801 = dma.vmem_to_hbm [thread:$0]  %s794, 256, %s796, %s741, 128, 128, 8
        $region72: #{tpu_custom_call.1} parent=39 // pred_fallthru
          _
      $region40: #{tpu_custom_call.1} parent=5 // pred_fallthru
        _
      %p802 = scmp.le.s32.totalorder 2, %s27
      // Predicated region
      $region73: #{tpu_custom_call.1} parent=5 // pred_check
        %p803 = pneg %p802
      $region74: #{tpu_custom_call.1} parent=5 // pred_check_branch
        %805 = sbr.rel (%p803) target = $region76
      $region75: #{tpu_custom_call.1} parent=5 // pred_region
        %s806 = ssub.s32 %s27, 2
        // Predicated region
        $region77: #{tpu_custom_call.1} parent=75 // pred_check
          %p807 = pneg %p192
        $region78: #{tpu_custom_call.1} parent=75 // pred_check_branch
          %809 = sbr.rel (%p807) target = $region80
        $region79: #{tpu_custom_call.1} parent=75 // pred_region
          %s810 = sand.u32 %s177, 1
          %s811 = scalar_lea.sflag [#allocation4], %s810
          %s812 = sand.u32 %s177, 1
          %s813 = smul.addr %s812, 16
          %s814 = scalar_lea.vmem [#allocation11], %s813
          %816 = dma.done %s811, 256
        $region80: #{tpu_custom_call.1} parent=75 // pred_fallthru
          _
        // Predicated region
        $region81: #{tpu_custom_call.1} parent=75 // pred_check
          %p817 = pneg %p220
        $region82: #{tpu_custom_call.1} parent=75 // pred_check_branch
          %819 = sbr.rel (%p817) target = $region84
        $region83: #{tpu_custom_call.1} parent=75 // pred_region
          %s820 = sand.u32 %s33, 1
          %s821 = scalar_lea.sflag [#allocation13], %s820
          %s822 = sand.u32 %s205, 1
          %s823 = smul.addr %s822, 16
          %s824 = scalar_lea.vmem [#allocation12], %s823
          %826 = dma.done %s821, 256
        $region84: #{tpu_custom_call.1} parent=75 // pred_fallthru
          _
        // Predicated region
        $region85: #{tpu_custom_call.1} parent=75 // pred_check
          %p827 = pneg %p248
        $region86: #{tpu_custom_call.1} parent=75 // pred_check_branch
          %829 = sbr.rel (%p827) target = $region88
        $region87: #{tpu_custom_call.1} parent=75 // pred_region
          %s830 = sand.u32 %s33, 1
          %s831 = scalar_lea.sflag [#allocation13], %s830
          %s832 = sand.u32 %s233, 1
          %s833 = smul.addr %s832, 16
          %s834 = scalar_lea.vmem [#allocation14], %s833
          %836 = dma.done %s831, 256
        $region88: #{tpu_custom_call.1} parent=75 // pred_fallthru
          _
      $region76: #{tpu_custom_call.1} parent=5 // pred_fallthru
        _
    $region6: #{tpu_custom_call.1} parent=1 // loop_footer
      %s31 = sadd.s32 1, %s27
    $region7: #{tpu_custom_call.1} parent=1 // loop_footer_branch
      %26 = sbr.rel target = $region3
    $region8: #{tpu_custom_call.1} parent=1 // loop_exit
      _
    %837 = vsyncpa [#allocation3], 1
    %s838 = scalar_lea.sflag [#allocation3], 1
    %839 = vsyncpa %s838, 1
    %840 = vsyncpa [#allocation6], 1
    %841 = vsyncpa [#allocation9], 1
    %s842 = scalar_lea.sflag [#allocation9], 1
    %843 = vsyncpa %s842, 1
    %844 = vsyncpa [#allocation4], 1
    %s845 = scalar_lea.sflag [#allocation4], 1
    %846 = vsyncpa %s845, 1
    %847 = vsyncpa [#allocation13], 1
    %s848 = scalar_lea.sflag [#allocation13], 1
    %849 = vsyncpa %s848, 1

// kernel: tpu_custom_call.1
$region0: #{tpu_custom_call.1}
  #allocation0 [shape = 'u32[]', space=smem, size = 0x4, offset = 0x4, fixed_abs, tag = 'smem constant byte address 0x4 - core index']
  #allocation1 [shape = 'u32[72,128]{1,0:T(1,128)}', space=vmem, size = 0x9000, scoped, tag = 'internal scratch']
  %s0 = inlined_call_operand.hbm [shape: f32[2,32,128], index: 0, kind: input, shape index: {}]
  %s1 = inlined_call_operand.hbm [shape: f32[1,128], index: 1, kind: input, shape index: {}]
  %s2 = inlined_call_operand.hbm [shape: f32[128,384], index: 2, kind: input, shape index: {}]
  %s3 = inlined_call_operand.hbm [shape: f32[32,64], index: 3, kind: input, shape index: {}]
  %s4 = inlined_call_operand.hbm [shape: f32[32,64], index: 4, kind: input, shape index: {}]
  %s5 = inlined_call_operand.hbm [shape: f32[2,32,128], index: 5, kind: output, shape index: {0}]
  %s6 = inlined_call_operand.hbm [shape: f32[2,32,128], index: 6, kind: output, shape index: {1}]
  %s7 = inlined_call_operand.hbm [shape: f32[2,32,128], index: 7, kind: output, shape index: {2}]
  %8 = xla_tuple %s5, %s6, %s7
  %s9 = sld [smem:[#allocation0]]
  $region89: #{tpu_custom_call.1} parent=0
    _
  %s11 = ssub.s32 1, %s9
  %s12 = scalar_select 0, %s11, %s9
  $region1: #{tpu_custom_call.1} parent=0
    #allocation2 [shape = 'u8[16384]{0}', space=vmem, size = 0x4000, scoped, tag = 'input window, operand 0']
    #allocation3 [shape = 's32[2]{0}', space=sflag, size = 0x8, scoped, tag = 'scoped memory for tpu_custom_call.1']
    #allocation4 [shape = 's32[2]{0}', space=sflag, size = 0x8, scoped, tag = 'scoped memory for tpu_custom_call.1']
    #allocation5 [shape = 'u8[512]{0}', space=vmem, size = 0x400, scoped, tag = 'input window, operand 1, single buffered']
    #allocation6 [shape = 's32[1]{0}', space=sflag, size = 0x4, scoped, tag = 'scoped memory for tpu_custom_call.1']
    #allocation7 [shape = 'u8[196608]{0}', space=vmem, size = 0x30000, scoped, tag = 'input window, operand 2, single buffered']
    #allocation8 [shape = 'u8[16384]{0}', space=vmem, size = 0x4000, scoped, tag = 'input window, operand 3']
    #allocation9 [shape = 's32[2]{0}', space=sflag, size = 0x8, scoped, tag = 'scoped memory for tpu_custom_call.1']
    #allocation10 [shape = 'u8[16384]{0}', space=vmem, size = 0x4000, scoped, tag = 'input window, operand 4']
    #allocation11 [shape = 'u8[16384]{0}', space=vmem, size = 0x4000, scoped, tag = 'output window, operand 0']
    #allocation12 [shape = 'u8[16384]{0}', space=vmem, size = 0x4000, scoped, tag = 'output window, operand 1']
    #allocation13 [shape = 's32[2]{0}', space=sflag, size = 0x8, scoped, tag = 'scoped memory for tpu_custom_call.1']
    #allocation14 [shape = 'u8[16384]{0}', space=vmem, size = 0x4000, scoped, tag = 'output window, operand 2']
    %13 = vsyncpa [#allocation3], 0
    %s14 = scalar_lea.sflag [#allocation3], 1
    %15 = vsyncpa %s14, 0
    %16 = vsyncpa [#allocation6], 0
    %17 = vsyncpa [#allocation9], 0
    %s18 = scalar_lea.sflag [#allocation9], 1
    %19 = vsyncpa %s18, 0
    %20 = vsyncpa [#allocation4], 0
    %s21 = scalar_lea.sflag [#allocation4], 1
    %22 = vsyncpa %s21, 0
    %23 = vsyncpa [#allocation13], 0
    %s24 = scalar_lea.sflag [#allocation13], 1
    %25 = vsyncpa %s24, 0
    loop: start=0, step=1, limit=6
    $region2: #{tpu_custom_call.1} parent=1 // loop_pre_header
      _
    $region3: #{tpu_custom_call.1} parent=1 // loop_header
      %s27 = sphi 0, %s31
      %p28 = scmp.ge.s32.totalorder %s27, 6
      %s34 = sphi 0, %s46
      %s35 = sphi 0, %s42
      %s36 = sphi 0, %s34
      %s37 = sphi 0, %s35
      %s38 = sphi 0, %s36
      %s39 = sphi 0, %s37
      %s51 = sphi 0, %s53
      %s54 = sphi 0, %s51
      %s55 = sphi 0, %s54
      %s71 = sphi 0, %s55
      %s75 = sphi 0, %s75
      %s77 = sphi 0, %s75
      %s78 = sphi 0, %s77
      %s92 = sphi 0, %s78
      %s96 = sphi 0, %s96
      %s98 = sphi 0, %s96
      %s99 = sphi 0, %s98
      %s113 = sphi 0, %s99
      %s119 = sphi 0, %s121
      %s122 = sphi 0, %s119
      %s123 = sphi 0, %s122
      %s139 = sphi 0, %s123
      %s145 = sphi 0, %s147
      %s148 = sphi 0, %s145
      %s149 = sphi 0, %s148
      %s165 = sphi 0, %s149
      %s173 = sphi 0, %s175
      %s176 = sphi 0, %s173
      %s177 = sphi 0, %s176
      %s193 = sphi 0, %s177
      %s201 = sphi 0, %s203
      %s204 = sphi 0, %s201
      %s205 = sphi 0, %s204
      %s221 = sphi 0, %s205
      %s229 = sphi 0, %s231
      %s232 = sphi 0, %s229
      %s233 = sphi 0, %s232
      %s249 = sphi 0, %s233
    $region4: #{tpu_custom_call.1} parent=1 // loop_header_branch
      %30 = sbr.rel (%p28) target = $region8
    $region5: #{tpu_custom_call.1} parent=1 // loop_body
      %s32 = ssub.s32 %s27, 1
      %s33 = ssub.s32 %s27, 2
      %s40 = sadd.s32 1, %s35
      %p41 = scmp.ge.s32.totalorder %s40, 2
      %s42 = scalar_select %p41, 0, %s40
      %s43 = sadd.s32 1, %s34
      %s44 = scalar_select %p41, %s43, %s34
      %p45 = scmp.ge.s32.totalorder %s44, 2
      %s46 = scalar_select %p45, 0, %s44
      %s47 = ssub.s32 %s34, %s46
      %s48 = ssub.s32 %s35, %s42
      %s49 = sor.u32 %s47, %s48
      %p50 = scmp.eq.s32.totalorder %s49, 0
      %s52 = sadd.s32 %s51, 1
      %s53 = scalar_select %p50, %s51, %s52
      %p56 = pneg %p50
      %p57 = scmp.eq.s32.totalorder %s27, 3
      %p58 = por %p56, %p57
      %p59 = scmp.ne.s32.totalorder %s51, %s54
      %p60 = scmp.eq.s32.totalorder %s27, 0
      %p61 = por %p59, %p60
      %p62 = scmp.ne.s32.totalorder %s51, %s54
      %p63 = scmp.eq.s32.totalorder %s32, 3
      %p64 = por %p62, %p63
      %p65 = scmp.ne.s32.totalorder %s54, %s55
      %p66 = scmp.eq.s32.totalorder %s32, 0
      %p67 = por %p65, %p66
      %p68 = scmp.ne.s32.totalorder %s54, %s55
      %p69 = scmp.eq.s32.totalorder %s33, 3
      %p70 = por %p68, %p69
      %p72 = scmp.ne.s32.totalorder %s55, %s71
      %p73 = scmp.eq.s32.totalorder %s33, 0
      %p74 = por %p72, %p73
      %s76 = sadd.s32 %s75, 1
      %p79 = scmp.eq.s32.totalorder %s27, 3
      %p80 = scmp.ne.s32.totalorder %s75, %s77
      %p81 = scmp.eq.s32.totalorder %s27, 0
      %p82 = por %p80, %p81
      %p83 = scmp.ne.s32.totalorder %s75, %s77
      %p84 = scmp.eq.s32.totalorder %s32, 3
      %p85 = por %p83, %p84
      %p86 = scmp.ne.s32.totalorder %s77, %s78
      %p87 = scmp.eq.s32.totalorder %s32, 0
      %p88 = por %p86, %p87
      %p89 = scmp.ne.s32.totalorder %s77, %s78
      %p90 = scmp.eq.s32.totalorder %s33, 3
      %p91 = por %p89, %p90
      %p93 = scmp.ne.s32.totalorder %s78, %s92
      %p94 = scmp.eq.s32.totalorder %s33, 0
      %p95 = por %p93, %p94
      %s97 = sadd.s32 %s96, 1
      %p100 = scmp.eq.s32.totalorder %s27, 3
      %p101 = scmp.ne.s32.totalorder %s96, %s98
      %p102 = scmp.eq.s32.totalorder %s27, 0
      %p103 = por %p101, %p102
      %p104 = scmp.ne.s32.totalorder %s96, %s98
      %p105 = scmp.eq.s32.totalorder %s32, 3
      %p106 = por %p104, %p105
      %p107 = scmp.ne.s32.totalorder %s98, %s99
      %p108 = scmp.eq.s32.totalorder %s32, 0
      %p109 = por %p107, %p108
      %p110 = scmp.ne.s32.totalorder %s98, %s99
      %p111 = scmp.eq.s32.totalorder %s33, 3
      %p112 = por %p110, %p111
      %p114 = scmp.ne.s32.totalorder %s99, %s113
      %p115 = scmp.eq.s32.totalorder %s33, 0
      %p116 = por %p114, %p115
      %s117 = ssub.s32 %s35, %s42
      %p118 = scmp.eq.s32.totalorder %s117, 0
      %s120 = sadd.s32 %s119, 1
      %s121 = scalar_select %p118, %s119, %s120
      %p124 = pneg %p118
      %p125 = scmp.eq.s32.totalorder %s27, 3
      %p126 = por %p124, %p125
      %p127 = scmp.ne.s32.totalorder %s119, %s122
      %p128 = scmp.eq.s32.totalorder %s27, 0
      %p129 = por %p127, %p128
      %p130 = scmp.ne.s32.totalorder %s119, %s122
      %p131 = scmp.eq.s32.totalorder %s32, 3
      %p132 = por %p130, %p131
      %p133 = scmp.ne.s32.totalorder %s122, %s123
      %p134 = scmp.eq.s32.totalorder %s32, 0
      %p135 = por %p133, %p134
      %p136 = scmp.ne.s32.totalorder %s122, %s123
      %p137 = scmp.eq.s32.totalorder %s33, 3
      %p138 = por %p136, %p137
      %p140 = scmp.ne.s32.totalorder %s123, %s139
      %p141 = scmp.eq.s32.totalorder %s33, 0
      %p142 = por %p140, %p141
      %s143 = ssub.s32 %s35, %s42
      %p144 = scmp.eq.s32.totalorder %s143, 0
      %s146 = sadd.s32 %s145, 1
      %s147 = scalar_select %p144, %s145, %s146
      %p150 = pneg %p144
      %p151 = scmp.eq.s32.totalorder %s27, 3
      %p152 = por %p150, %p151
      %p153 = scmp.ne.s32.totalorder %s145, %s148
      %p154 = scmp.eq.s32.totalorder %s27, 0
      %p155 = por %p153, %p154
      %p156 = scmp.ne.s32.totalorder %s145, %s148
      %p157 = scmp.eq.s32.totalorder %s32, 3
      %p158 = por %p156, %p157
      %p159 = scmp.ne.s32.totalorder %s148, %s149
      %p160 = scmp.eq.s32.totalorder %s32, 0
      %p161 = por %p159, %p160
      %p162 = scmp.ne.s32.totalorder %s148, %s149
      %p163 = scmp.eq.s32.totalorder %s33, 3
      %p164 = por %p162, %p163
      %p166 = scmp.ne.s32.totalorder %s149, %s165
      %p167 = scmp.eq.s32.totalorder %s33, 0
      %p168 = por %p166, %p167
      %s169 = ssub.s32 %s34, %s46
      %s170 = ssub.s32 %s35, %s42
      %s171 = sor.u32 %s169, %s170
      %p172 = scmp.eq.s32.totalorder %s171, 0
      %s174 = sadd.s32 %s173, 1
      %s175 = scalar_select %p172, %s173, %s174
      %p178 = pneg %p172
      %p179 = scmp.eq.s32.totalorder %s27, 3
      %p180 = por %p178, %p179
      %p181 = scmp.ne.s32.totalorder %s173, %s176
      %p182 = scmp.eq.s32.totalorder %s27, 0
      %p183 = por %p181, %p182
      %p184 = scmp.ne.s32.totalorder %s173, %s176
      %p185 = scmp.eq.s32.totalorder %s32, 3
      %p186 = por %p184, %p185
      %p187 = scmp.ne.s32.totalorder %s176, %s177
      %p188 = scmp.eq.s32.totalorder %s32, 0
      %p189 = por %p187, %p188
      %p190 = scmp.ne.s32.totalorder %s176, %s177
      %p191 = scmp.eq.s32.totalorder %s33, 3
      %p192 = por %p190, %p191
      %p194 = scmp.ne.s32.totalorder %s177, %s193
      %p195 = scmp.eq.s32.totalorder %s33, 0
      %p196 = por %p194, %p195
      %s197 = ssub.s32 %s34, %s46
      %s198 = ssub.s32 %s35, %s42
      %s199 = sor.u32 %s197, %s198
      %p200 = scmp.eq.s32.totalorder %s199, 0
      %s202 = sadd.s32 %s201, 1
      %s203 = scalar_select %p200, %s201, %s202
      %p206 = pneg %p200
      %p207 = scmp.eq.s32.totalorder %s27, 3
      %p208 = por %p206, %p207
      %p209 = scmp.ne.s32.totalorder %s201, %s204
      %p210 = scmp.eq.s32.totalorder %s27, 0
      %p211 = por %p209, %p210
      %p212 = scmp.ne.s32.totalorder %s201, %s204
      %p213 = scmp.eq.s32.totalorder %s32, 3
      %p214 = por %p212, %p213
      %p215 = scmp.ne.s32.totalorder %s204, %s205
      %p216 = scmp.eq.s32.totalorder %s32, 0
      %p217 = por %p215, %p216
      %p218 = scmp.ne.s32.totalorder %s204, %s205
      %p219 = scmp.eq.s32.totalorder %s33, 3
      %p220 = por %p218, %p219
      %p222 = scmp.ne.s32.totalorder %s205, %s221
      %p223 = scmp.eq.s32.totalorder %s33, 0
      %p224 = por %p222, %p223
      %s225 = ssub.s32 %s34, %s46
      %s226 = ssub.s32 %s35, %s42
      %s227 = sor.u32 %s225, %s226
      %p228 = scmp.eq.s32.totalorder %s227, 0
      %s230 = sadd.s32 %s229, 1
      %s231 = scalar_select %p228, %s229, %s230
      %p234 = pneg %p228
      %p235 = scmp.eq.s32.totalorder %s27, 3
      %p236 = por %p234, %p235
      %p237 = scmp.ne.s32.totalorder %s229, %s232
      %p238 = scmp.eq.s32.totalorder %s27, 0
      %p239 = por %p237, %p238
      %p240 = scmp.ne.s32.totalorder %s229, %s232
      %p241 = scmp.eq.s32.totalorder %s32, 3
      %p242 = por %p240, %p241
      %p243 = scmp.ne.s32.totalorder %s232, %s233
      %p244 = scmp.eq.s32.totalorder %s32, 0
      %p245 = por %p243, %p244
      %p246 = scmp.ne.s32.totalorder %s232, %s233
      %p247 = scmp.eq.s32.totalorder %s33, 3
      %p248 = por %p246, %p247
      %p250 = scmp.ne.s32.totalorder %s233, %s249
      %p251 = scmp.eq.s32.totalorder %s33, 0
      %p252 = por %p250, %p251
      %p253 = scmp.le.s32.totalorder 1, %s27
      %p254 = scmp.lt.s32.totalorder %s27, 5
      %p255 = pnand %p253, %p254
      %p256 = pneg %p255
      // Predicated region
      $region9: #{tpu_custom_call.1} parent=5 // pred_check
        _
      $region10: #{tpu_custom_call.1} parent=5 // pred_check_branch
        %258 = sbr.rel (%p255) target = $region12
      $region11: #{tpu_custom_call.1} parent=5 // pred_region
        %s259 = ssub.s32 %s27, 1
        // Predicated region
        $region13: #{tpu_custom_call.1} parent=11 // pred_check
          %p260 = pneg %p88
        $region14: #{tpu_custom_call.1} parent=11 // pred_check_branch
          %262 = sbr.rel (%p260) target = $region16
        $region15: #{tpu_custom_call.1} parent=11 // pred_region
          %264 = vsyncadd [#allocation6], 0
          %s266 = sshll.u32 %s1, 4
          %s267 = int_to_ptr.hbm [resolvable:$true] %s266
          %s268 = sshll.u32 [#allocation5], 4
          %s269 = int_to_ptr.vmem [resolvable:$true] %s268
          %271 = dma.hbm_to_vmem [thread:$0]  %s267, 16, %s269, [#allocation6]
        $region16: #{tpu_custom_call.1} parent=11 // pred_fallthru
          _
        // Predicated region
        $region17: #{tpu_custom_call.1} parent=11 // pred_check
          %p272 = pneg %p109
        $region18: #{tpu_custom_call.1} parent=11 // pred_check_branch
          %274 = sbr.rel (%p272) target = $region20
        $region19: #{tpu_custom_call.1} parent=11 // pred_region
          %276 = vsyncadd [#allocation6], 0
          %s277 = sshll.u32 %s2, 4
          %s278 = int_to_ptr.hbm [resolvable:$true] %s277
          %s279 = sshll.u32 [#allocation7], 4
          %s280 = int_to_ptr.vmem [resolvable:$true] %s279
          %285 = dma.hbm_to_vmem [thread:$0]  %s278, 6144, %s280, [#allocation6], 384, 384, 24
        $region20: #{tpu_custom_call.1} parent=11 // pred_fallthru
          _
      $region12: #{tpu_custom_call.1} parent=5 // pred_fallthru
        _
      %p286 = scmp.lt.s32.totalorder %s27, 4
      // Predicated region
      $region21: #{tpu_custom_call.1} parent=5 // pred_check
        %p287 = pneg %p286
      $region22: #{tpu_custom_call.1} parent=5 // pred_check_branch
        %289 = sbr.rel (%p287) target = $region24
      $region23: #{tpu_custom_call.1} parent=5 // pred_region
        // Predicated region
        $region25: #{tpu_custom_call.1} parent=23 // pred_check
          %p290 = pneg %p61
        $region26: #{tpu_custom_call.1} parent=23 // pred_check_branch
          %292 = sbr.rel (%p290) target = $region28
        $region27: #{tpu_custom_call.1} parent=23 // pred_region
          %s293 = sand.u32 %s51, 1
          %s294 = scalar_lea.sflag [#allocation3], %s293
          %s295 = sand.u32 %s51, 1
          %s296 = smul.addr %s295, 16
          %s297 = scalar_lea.vmem [#allocation2], %s296
          %s298 = smul.u32 2, %s35
          %300 = vsyncadd %s294, 0
          %s301 = smul.addr %s34, 4
          %s302 = sadd.s32 %s298, %s301
          %s303 = smul.addr %s302, 8
          %s304 = scalar_lea.hbm %s0, %s303
          %s305 = sshll.u32 %s304, 4
          %s306 = int_to_ptr.hbm [resolvable:$true] %s305
          %s307 = sshll.u32 %s297, 4
          %s308 = int_to_ptr.vmem [resolvable:$true] %s307
          %313 = dma.hbm_to_vmem [thread:$0]  %s306, 256, %s308, %s294, 128, 128, 8
        $region28: #{tpu_custom_call.1} parent=23 // pred_fallthru
          _
        // Predicated region
        $region29: #{tpu_custom_call.1} parent=23 // pred_check
          %p314 = pneg %p129
        $region30: #{tpu_custom_call.1} parent=23 // pred_check_branch
          %316 = sbr.rel (%p314) target = $region32
        $region31: #{tpu_custom_call.1} parent=23 // pred_region
          %s317 = sand.u32 %s27, 1
          %s318 = scalar_lea.sflag [#allocation9], %s317
          %s319 = sand.u32 %s119, 1
          %s320 = smul.addr %s319, 16
          %s321 = scalar_lea.vmem [#allocation8], %s320
          %s322 = smul.u32 2, %s35
          %324 = vsyncadd %s318, 0
          %s325 = smul.addr %s322, 8
          %s326 = scalar_lea.hbm %s3, %s325
          %s327 = sshll.u32 %s326, 4
          %s328 = int_to_ptr.hbm [resolvable:$true] %s327
          %s329 = sshll.u32 %s321, 4
          %s330 = int_to_ptr.vmem [resolvable:$true] %s329
          %335 = dma.hbm_to_vmem [thread:$0]  %s328, 256, %s330, %s318, 128, 128, 8
        $region32: #{tpu_custom_call.1} parent=23 // pred_fallthru
          _
        // Predicated region
        $region33: #{tpu_custom_call.1} parent=23 // pred_check
          %p336 = pneg %p155
        $region34: #{tpu_custom_call.1} parent=23 // pred_check_branch
          %338 = sbr.rel (%p336) target = $region36
        $region35: #{tpu_custom_call.1} parent=23 // pred_region
          %s339 = sand.u32 %s27, 1
          %s340 = scalar_lea.sflag [#allocation9], %s339
          %s341 = sand.u32 %s145, 1
          %s342 = smul.addr %s341, 16
          %s343 = scalar_lea.vmem [#allocation10], %s342
          %s344 = smul.u32 2, %s35
          %346 = vsyncadd %s340, 0
          %s347 = smul.addr %s344, 8
          %s348 = scalar_lea.hbm %s4, %s347
          %s349 = sshll.u32 %s348, 4
          %s350 = int_to_ptr.hbm [resolvable:$true] %s349
          %s351 = sshll.u32 %s343, 4
          %s352 = int_to_ptr.vmem [resolvable:$true] %s351
          %357 = dma.hbm_to_vmem [thread:$0]  %s350, 256, %s352, %s340, 128, 128, 8
        $region36: #{tpu_custom_call.1} parent=23 // pred_fallthru
          _
      $region24: #{tpu_custom_call.1} parent=5 // pred_fallthru
        _
      %p358 = scmp.le.s32.totalorder 1, %s27
      %p359 = scmp.lt.s32.totalorder %s27, 5
      %p360 = pnand %p358, %p359
      %p361 = pneg %p360
      // Predicated region
      $region37: #{tpu_custom_call.1} parent=5 // pred_check
        _
      $region38: #{tpu_custom_call.1} parent=5 // pred_check_branch
        %363 = sbr.rel (%p360) target = $region40
      $region39: #{tpu_custom_call.1} parent=5 // pred_region
        %s364 = ssub.s32 %s27, 1
        %s365 = sand.u32 %s54, 1
        %s366 = scalar_lea.sflag [#allocation3], %s365
        %s367 = sand.u32 %s54, 1
        %s368 = smul.addr %s367, 16
        %s369 = scalar_lea.vmem [#allocation2], %s368
        // Predicated region
        $region41: #{tpu_custom_call.1} parent=39 // pred_check
          %p370 = pneg %p67
        $region42: #{tpu_custom_call.1} parent=39 // pred_check_branch
          %372 = sbr.rel (%p370) target = $region44
        $region43: #{tpu_custom_call.1} parent=39 // pred_region
          %374 = dma.done %s366, 256
        $region44: #{tpu_custom_call.1} parent=39 // pred_fallthru
          _
        // Predicated region
        $region45: #{tpu_custom_call.1} parent=39 // pred_check
          %p375 = pneg %p88
        $region46: #{tpu_custom_call.1} parent=39 // pred_check_branch
          %377 = sbr.rel (%p375) target = $region48
        $region47: #{tpu_custom_call.1} parent=39 // pred_region
          %379 = dma.done [#allocation6], 16
        $region48: #{tpu_custom_call.1} parent=39 // pred_fallthru
          _
        // Predicated region
        $region49: #{tpu_custom_call.1} parent=39 // pred_check
          %p380 = pneg %p109
        $region50: #{tpu_custom_call.1} parent=39 // pred_check_branch
          %382 = sbr.rel (%p380) target = $region52
        $region51: #{tpu_custom_call.1} parent=39 // pred_region
          %384 = dma.done [#allocation6], 6144
        $region52: #{tpu_custom_call.1} parent=39 // pred_fallthru
          _
        %s385 = sand.u32 %s32, 1
        %s386 = scalar_lea.sflag [#allocation9], %s385
        %s387 = sand.u32 %s122, 1
        %s388 = smul.addr %s387, 16
        %s389 = scalar_lea.vmem [#allocation8], %s388
        // Predicated region
        $region53: #{tpu_custom_call.1} parent=39 // pred_check
          %p390 = pneg %p135
        $region54: #{tpu_custom_call.1} parent=39 // pred_check_branch
          %392 = sbr.rel (%p390) target = $region56
        $region55: #{tpu_custom_call.1} parent=39 // pred_region
          %394 = dma.done %s386, 256
        $region56: #{tpu_custom_call.1} parent=39 // pred_fallthru
          _
        %s395 = sand.u32 %s32, 1
        %s396 = scalar_lea.sflag [#allocation9], %s395
        %s397 = sand.u32 %s148, 1
        %s398 = smul.addr %s397, 16
        %s399 = scalar_lea.vmem [#allocation10], %s398
        // Predicated region
        $region57: #{tpu_custom_call.1} parent=39 // pred_check
          %p400 = pneg %p161
        $region58: #{tpu_custom_call.1} parent=39 // pred_check_branch
          %402 = sbr.rel (%p400) target = $region60
        $region59: #{tpu_custom_call.1} parent=39 // pred_region
          %404 = dma.done %s396, 256
        $region60: #{tpu_custom_call.1} parent=39 // pred_fallthru
          _
        %s405 = sand.u32 %s54, 1
        %s406 = scalar_lea.sflag [#allocation3], %s405
        %s407 = sand.u32 %s54, 1
        %s408 = smul.addr %s407, 16
        %s409 = scalar_lea.vmem [#allocation2], %s408
        %p410 = pneg %p67
        %p411 = pneg %p64
        %p412 = pneg %p88
        %p413 = pneg %p85
        %p414 = pneg %p109
        %p415 = pneg %p106
        %s416 = sand.u32 %s32, 1
        %s417 = scalar_lea.sflag [#allocation9], %s416
        %s418 = sand.u32 %s122, 1
        %s419 = smul.addr %s418, 16
        %s420 = scalar_lea.vmem [#allocation8], %s419
        %p421 = pneg %p135
        %p422 = pneg %p132
        %s423 = sand.u32 %s32, 1
        %s424 = scalar_lea.sflag [#allocation9], %s423
        %s425 = sand.u32 %s148, 1
        %s426 = smul.addr %s425, 16
        %s427 = scalar_lea.vmem [#allocation10], %s426
        %p428 = pneg %p161
        %p429 = pneg %p158
        %p430 = pneg %p189
        %p431 = pneg %p186
        %s432 = sand.u32 %s176, 1
        %s433 = scalar_lea.sflag [#allocation4], %s432
        %s434 = sand.u32 %s176, 1
        %s435 = smul.addr %s434, 16
        %s436 = scalar_lea.vmem [#allocation11], %s435
        %p437 = pneg %p217
        %p438 = pneg %p214
        %s439 = sand.u32 %s32, 1
        %s440 = scalar_lea.sflag [#allocation13], %s439
        %s441 = sand.u32 %s204, 1
        %s442 = smul.addr %s441, 16
        %s443 = scalar_lea.vmem [#allocation12], %s442
        %p444 = pneg %p245
        %p445 = pneg %p242
        %s446 = sand.u32 %s32, 1
        %s447 = scalar_lea.sflag [#allocation13], %s446
        %s448 = sand.u32 %s232, 1
        %s449 = smul.addr %s448, 16
        %s450 = scalar_lea.vmem [#allocation14], %s449
        %s451 = smul.u32 2, %s37
        %s452 = smul.u32 2, %s37
        %s453 = smul.u32 2, %s37
        %s454 = smul.u32 2, %s37
        %s455 = smul.u32 2, %s37
        %s456 = smul.u32 2, %s37
        %v457 = vld [vmem:[%s369] sm:$0xff]
        %v458 = vld [vmem:[%s369 + $0x8] sm:$0xff]
        %v459 = vmul.f32 %v457, %v457
        %v460 = vmul.f32 %v458, %v458
        %461 = vadd.xlane.f32.xlu0 %v459
        %v462 = vpop.xlane.xlu0 %461
        %463 = vadd.xlane.f32.xlu0 %v460
        %v464 = vpop.xlane.xlu0 %463
        %v465 = vrsqrt.pop %v462
        %v466 = vmul.f32 %v465, %v462
        %v467 = vmul.f32 %v466, %v465
        %v468 = vmul.f32 0.5, %v467
        %v469 = vsub.f32 1.5, %v468
        %v470 = vmul.f32 %v465, %v469
        %v471 = vmul.f32 %v462, %v470
        %vm472 = vcmp.eq.f32.partialorder %v462, inf
        %v473 = vsel %vm472, %v462, %v471
        %vm474 = vcmp.eq.f32.partialorder %v462, 0.0
        %v475 = vand.u32 %v462, 2147483648
        %v476 = vsel %vm474, %v475, %v473
        %v477 = vrsqrt.pop %v464
        %v478 = vmul.f32 %v477, %v464
        %v479 = vmul.f32 %v478, %v477
        %v480 = vmul.f32 0.5, %v479
        %v481 = vsub.f32 1.5, %v480
        %v482 = vmul.f32 %v477, %v481
        %v483 = vmul.f32 %v464, %v482
        %vm484 = vcmp.eq.f32.partialorder %v464, inf
        %v485 = vsel %vm484, %v464, %v483
        %vm486 = vcmp.eq.f32.partialorder %v464, 0.0
        %v487 = vand.u32 %v464, 2147483648
        %v488 = vsel %vm486, %v487, %v485
        %v489 = vmax.f32 %v476, 1e-12
        %v490 = vmax.f32 %v488, 1e-12
        %v491 = vrcp.pop %v489
        %v492 = vmul.f32 %v489, %v491
        %v493 = vsub.f32 1.0, %v492
        %v494 = vmul.f32 %v491, %v493
        %v495 = vadd.f32 %v491, %v494
        %vm496 = vweird.f32 %v489
        %vm497 = vweird.f32 %v491
        %vm498 = vmor %vm496, %vm497
        %v499 = vsel %vm498, %v491, %v495
        %v500 = vand.u32 2147483647, %v489
        %vm501 = vcmp.eq.f32.partialorder %v500, 8.507059e+37
        %v502 = vand.u32 %v489, 2147483648
        %v503 = vor.u32 1.1754944e-38, %v502
        %v504 = vsel %vm501, %v503, %v499
        %v505 = vmul.f32 %v457, %v504
        %v506 = vrcp.pop %v490
        %v507 = vmul.f32 %v490, %v506
        %v508 = vsub.f32 1.0, %v507
        %v509 = vmul.f32 %v506, %v508
        %v510 = vadd.f32 %v506, %v509
        %vm511 = vweird.f32 %v490
        %vm512 = vweird.f32 %v506
        %vm513 = vmor %vm511, %vm512
        %v514 = vsel %vm513, %v506, %v510
        %v515 = vand.u32 2147483647, %v490
        %vm516 = vcmp.eq.f32.partialorder %v515, 8.507059e+37
        %v517 = vand.u32 %v490, 2147483648
        %v518 = vor.u32 1.1754944e-38, %v517
        %v519 = vsel %vm516, %v518, %v514
        %v520 = vmul.f32 %v458, %v519
        %v521 = vmul.f32 %v505, 11.313708
        %v522 = vmul.f32 %v520, 11.313708
        %v523 = vld [vmem:[#allocation5] sm:$0x1]
        %v525 = vperm.slane %v523, 0
        %v527 = vmul.f32 %v521, %v525
        %v528 = vmul.f32 %v522, %v525
        %v529 = vld [vmem:[#allocation7] sm:$0xff]
        %v530 = vld [vmem:[#allocation7 + $0x8] sm:$0xff]
        %v531 = vld [vmem:[#allocation7 + $0x10] sm:$0xff]
        %v532 = vld [vmem:[#allocation7 + $0x18] sm:$0xff]
        %v533 = vld [vmem:[#allocation7 + $0x20] sm:$0xff]
        %v534 = vld [vmem:[#allocation7 + $0x28] sm:$0xff]
        %v535 = vld [vmem:[#allocation7 + $0x30] sm:$0xff]
        %v536 = vld [vmem:[#allocation7 + $0x38] sm:$0xff]
        %v537 = vld [vmem:[#allocation7 + $0x40] sm:$0xff]
        %v538 = vld [vmem:[#allocation7 + $0x48] sm:$0xff]
        %v539 = vld [vmem:[#allocation7 + $0x50] sm:$0xff]
        %v540 = vld [vmem:[#allocation7 + $0x58] sm:$0xff]
        %v541 = vld [vmem:[#allocation7 + $0x60] sm:$0xff]
        %v542 = vld [vmem:[#allocation7 + $0x68] sm:$0xff]
        %v543 = vld [vmem:[#allocation7 + $0x70] sm:$0xff]
        %v544 = vld [vmem:[#allocation7 + $0x78] sm:$0xff]
        %v545 = vld [vmem:[#allocation7 + $0x80] sm:$0xff]
        %v546 = vld [vmem:[#allocation7 + $0x88] sm:$0xff]
        %v547 = vld [vmem:[#allocation7 + $0x90] sm:$0xff]
        %v548 = vld [vmem:[#allocation7 + $0x98] sm:$0xff]
        %v549 = vld [vmem:[#allocation7 + $0xa0] sm:$0xff]
        %v550 = vld [vmem:[#allocation7 + $0xa8] sm:$0xff]
        %v551 = vld [vmem:[#allocation7 + $0xb0] sm:$0xff]
        %v552 = vld [vmem:[#allocation7 + $0xb8] sm:$0xff]
        %v553 = vld [vmem:[#allocation7 + $0xc0] sm:$0xff]
        %v554 = vld [vmem:[#allocation7 + $0xc8] sm:$0xff]
        %v555 = vld [vmem:[#allocation7 + $0xd0] sm:$0xff]
        %v556 = vld [vmem:[#allocation7 + $0xd8] sm:$0xff]
        %v557 = vld [vmem:[#allocation7 + $0xe0] sm:$0xff]
        %v558 = vld [vmem:[#allocation7 + $0xe8] sm:$0xff]
        %v559 = vld [vmem:[#allocation7 + $0xf0] sm:$0xff]
        %v560 = vld [vmem:[#allocation7 + $0xf8] sm:$0xff]
        %v561 = vld [vmem:[#allocation7 + $0x100] sm:$0xff]
        %v562 = vld [vmem:[#allocation7 + $0x108] sm:$0xff]
        %v563 = vld [vmem:[#allocation7 + $0x110] sm:$0xff]
        %v564 = vld [vmem:[#allocation7 + $0x118] sm:$0xff]
        %v565 = vld [vmem:[#allocation7 + $0x120] sm:$0xff]
        %v566 = vld [vmem:[#allocation7 + $0x128] sm:$0xff]
        %v567 = vld [vmem:[#allocation7 + $0x130] sm:$0xff]
        %v568 = vld [vmem:[#allocation7 + $0x138] sm:$0xff]
        %v569 = vld [vmem:[#allocation7 + $0x140] sm:$0xff]
        %v570 = vld [vmem:[#allocation7 + $0x148] sm:$0xff]
        %v571 = vld [vmem:[#allocation7 + $0x150] sm:$0xff]
        %v572 = vld [vmem:[#allocation7 + $0x158] sm:$0xff]
        %v573 = vld [vmem:[#allocation7 + $0x160] sm:$0xff]
        %v574 = vld [vmem:[#allocation7 + $0x168] sm:$0xff]
        %v575 = vld [vmem:[#allocation7 + $0x170] sm:$0xff]
        %v576 = vld [vmem:[#allocation7 + $0x178] sm:$0xff]
        %577 = vmatpush.msra.mxu0 %v574
        %578 = vmatpush.msra.mxu0 %v571
        %579 = vmatpush.msra.mxu0 %v568
        %580 = vmatpush.msra.mxu0 %v565
        %581 = vmatpush.msra.mxu0 %v562
        %582 = vmatpush.msra.mxu0 %v559
        %583 = vmatpush.msra.mxu0 %v556
        %584 = vmatpush.msra.mxu0 %v553
        %585 = vmatpush.msra.mxu0 %v550
        %586 = vmatpush.msra.mxu0 %v547
        %587 = vmatpush.msra.mxu0 %v544
        %588 = vmatpush.msra.mxu0 %v541
        %589 = vmatpush.msra.mxu0 %v538
        %590 = vmatpush.msra.mxu0 %v535
        %591 = vmatpush.msra.mxu0 %v532
        %592 = vmatpush.msra.mxu0 %v529
        %593 = vmatmul.f32.gmra.mxu0 %v527
        %v594 = vpop.f32.mrf.mxu0
        %v595 = vadd.f32 0.0, %v594
        %596 = vmatmul.f32.gmra.mxu0 %v528
        %v597 = vpop.f32.mrf.mxu0
        %v598 = vadd.f32 0.0, %v597
        %599 = vdwg.mxu0
        %600 = vmatpush.msra.mxu0 %v575
        %601 = vmatpush.msra.mxu0 %v572
        %602 = vmatpush.msra.mxu0 %v569
        %603 = vmatpush.msra.mxu0 %v566
        %604 = vmatpush.msra.mxu0 %v563
        %605 = vmatpush.msra.mxu0 %v560
        %606 = vmatpush.msra.mxu0 %v557
        %607 = vmatpush.msra.mxu0 %v554
        %608 = vmatpush.msra.mxu0 %v551
        %609 = vmatpush.msra.mxu0 %v548
        %610 = vmatpush.msra.mxu0 %v545
        %611 = vmatpush.msra.mxu0 %v542
        %612 = vmatpush.msra.mxu0 %v539
        %613 = vmatpush.msra.mxu0 %v536
        %614 = vmatpush.msra.mxu0 %v533
        %615 = vmatpush.msra.mxu0 %v530
        %616 = vmatmul.f32.gmra.mxu0 %v527
        %v617 = vpop.f32.mrf.mxu0
        %v618 = vadd.f32 0.0, %v617
        %619 = vmatmul.f32.gmra.mxu0 %v528
        %v620 = vpop.f32.mrf.mxu0
        %v621 = vadd.f32 0.0, %v620
        %622 = vdwg.mxu0
        %623 = vmatpush.msra.mxu0 %v576
        %624 = vmatpush.msra.mxu0 %v573
        %625 = vmatpush.msra.mxu0 %v570
        %626 = vmatpush.msra.mxu0 %v567
        %627 = vmatpush.msra.mxu0 %v564
        %628 = vmatpush.msra.mxu0 %v561
        %629 = vmatpush.msra.mxu0 %v558
        %630 = vmatpush.msra.mxu0 %v555
        %631 = vmatpush.msra.mxu0 %v552
        %632 = vmatpush.msra.mxu0 %v549
        %633 = vmatpush.msra.mxu0 %v546
        %634 = vmatpush.msra.mxu0 %v543
        %635 = vmatpush.msra.mxu0 %v540
        %636 = vmatpush.msra.mxu0 %v537
        %637 = vmatpush.msra.mxu0 %v534
        %638 = vmatpush.msra.mxu0 %v531
        %639 = vmatmul.f32.gmra.mxu0 %v527
        %v640 = vpop.f32.mrf.mxu0
        %v641 = vadd.f32 0.0, %v640
        %642 = vmatmul.f32.gmra.mxu0 %v528
        %v643 = vpop.f32.mrf.mxu0
        %v644 = vadd.f32 0.0, %v643
        %645 = vdwg.mxu0
        %v646 = vld [vmem:[%s389] sm:$0xff]
        %v647 = vld [vmem:[%s389 + $0x8] sm:$0xff]
        %650 = vrot.lane.b32.xlu0 %v646, 64
        %v651 = vpop.permute.xlu0 %650
        %652 = vrot.lane.b32.xlu0 %v647, 64
        %v653 = vpop.permute.xlu0 %652
        %vm656 = vcmask 523264
        %v657 = vsel %vm656, %v646, %v651
        %v658 = vsel %vm656, %v647, %v653
        %v659 = vld [vmem:[%s399] sm:$0xff]
        %v660 = vld [vmem:[%s399 + $0x8] sm:$0xff]
        %663 = vrot.lane.b32.xlu0 %v659, 64
        %v664 = vpop.permute.xlu0 %663
        %665 = vrot.lane.b32.xlu0 %v660, 64
        %v666 = vpop.permute.xlu0 %665
        %v669 = vsel %vm656, %v659, %v664
        %v670 = vsel %vm656, %v660, %v666
        %v671 = vlaneseq
        %v672 = vand.u32 %v671, 127
        %vm673 = vcmp.lt.s32.totalorder %v672, 0
        %v674 = vsub.s32 0, %v672
        %v675 = vsel %vm673, %v674, %v672
        %v676 = vshrl.u32 %v675, 6
        %v677 = vand.u32 %v675, 63
        %v678 = vsub.s32 0, %v677
        %v679 = vsel %vm673, %v678, %v677
        %vm680 = vcmp.ne.s32.totalorder %v679, 0
        %vm681 = vcmp.lt.s32.totalorder %v679, 0
        %vm682 = vmand %vm681, %vm680
        %v683 = vadd.s32 %v679, 64
        %v684 = vsel %vm682, %v683, %v679
        %vm685 = vcmp.lt.s32.totalorder %v684, 32
        %686 = vrot.lane.b32.xlu0 %v595, 96
        %v687 = vpop.permute.xlu0 %686
        %688 = vrot.lane.b32.xlu0 %v598, 96
        %v689 = vpop.permute.xlu0 %688
        %690 = vrot.lane.b32.xlu0 %v595, 32
        %v691 = vpop.permute.xlu0 %690
        %692 = vrot.lane.b32.xlu0 %v598, 32
        %v693 = vpop.permute.xlu0 %692
        %v694 = vsub.f32 0.0, %v687
        %v695 = vsub.f32 0.0, %v689
        %v696 = vsel %vm685, %v694, %v691
        %v697 = vsel %vm685, %v695, %v693
        %v698 = vmul.f32 %v595, %v657
        %v699 = vmul.f32 %v598, %v658
        %v700 = vmul.f32 %v696, %v669
        %v701 = vmul.f32 %v697, %v670
        %v702 = vadd.f32 %v698, %v700
        %v703 = vadd.f32 %v699, %v701
        %704 = vrot.lane.b32.xlu0 %v618, 96
        %v705 = vpop.permute.xlu0 %704
        %706 = vrot.lane.b32.xlu0 %v621, 96
        %v707 = vpop.permute.xlu0 %706
        %708 = vrot.lane.b32.xlu0 %v618, 32
        %v709 = vpop.permute.xlu0 %708
        %710 = vrot.lane.b32.xlu0 %v621, 32
        %v711 = vpop.permute.xlu0 %710
        %v712 = vsub.f32 0.0, %v705
        %v713 = vsub.f32 0.0, %v707
        %v714 = vsel %vm685, %v712, %v709
        %v715 = vsel %vm685, %v713, %v711
        %v716 = vmul.f32 %v618, %v657
        %v717 = vmul.f32 %v621, %v658
        %v718 = vmul.f32 %v714, %v669
        %v719 = vmul.f32 %v715, %v670
        %v720 = vadd.f32 %v716, %v718
        %v721 = vadd.f32 %v717, %v719
        %v722 = vmul.f32 %v702, 0.125
        %v723 = vmul.f32 %v703, 0.125
        %724 = vst [vmem:[%s436] sm:$0xff] %v722
        %725 = vst [vmem:[%s436 + $0x8] sm:$0xff] %v723
        %726 = vst [vmem:[%s443] sm:$0xff] %v720
        %727 = vst [vmem:[%s443 + $0x8] sm:$0xff] %v721
        %728 = vst [vmem:[%s450] sm:$0xff] %v641
        %729 = vst [vmem:[%s450 + $0x8] sm:$0xff] %v644
        %s730 = sand.u32 %s176, 1
        %s731 = scalar_lea.sflag [#allocation4], %s730
        %s732 = sand.u32 %s176, 1
        %s733 = smul.addr %s732, 16
        %s734 = scalar_lea.vmem [#allocation11], %s733
        %s735 = sand.u32 %s32, 1
        %s736 = scalar_lea.sflag [#allocation13], %s735
        %s737 = sand.u32 %s204, 1
        %s738 = smul.addr %s737, 16
        %s739 = scalar_lea.vmem [#allocation12], %s738
        %s740 = sand.u32 %s32, 1
        %s741 = scalar_lea.sflag [#allocation13], %s740
        %s742 = sand.u32 %s232, 1
        %s743 = smul.addr %s742, 16
        %s744 = scalar_lea.vmem [#allocation14], %s743
        // Predicated region
        $region61: #{tpu_custom_call.1} parent=39 // pred_check
          %p745 = pneg %p186
        $region62: #{tpu_custom_call.1} parent=39 // pred_check_branch
          %747 = sbr.rel (%p745) target = $region64
        $region63: #{tpu_custom_call.1} parent=39 // pred_region
          %s748 = smul.u32 2, %s37
          %750 = vsyncadd %s731, 0
          %s751 = smul.addr %s36, 4
          %s752 = sadd.s32 %s748, %s751
          %s753 = smul.addr %s752, 8
          %s754 = scalar_lea.hbm %s5, %s753
          %s755 = sshll.u32 %s734, 4
          %s756 = int_to_ptr.vmem [resolvable:$true] %s755
          %s757 = sshll.u32 %s754, 4
          %s758 = int_to_ptr.hbm [resolvable:$true] %s757
          %763 = dma.vmem_to_hbm [thread:$0]  %s756, 256, %s758, %s731, 128, 128, 8
        $region64: #{tpu_custom_call.1} parent=39 // pred_fallthru
          _
        // Predicated region
        $region65: #{tpu_custom_call.1} parent=39 // pred_check
          %p764 = pneg %p214
        $region66: #{tpu_custom_call.1} parent=39 // pred_check_branch
          %766 = sbr.rel (%p764) target = $region68
        $region67: #{tpu_custom_call.1} parent=39 // pred_region
          %s767 = smul.u32 2, %s37
          %769 = vsyncadd %s736, 0
          %s770 = smul.addr %s36, 4
          %s771 = sadd.s32 %s767, %s770
          %s772 = smul.addr %s771, 8
          %s773 = scalar_lea.hbm %s6, %s772
          %s774 = sshll.u32 %s739, 4
          %s775 = int_to_ptr.vmem [resolvable:$true] %s774
          %s776 = sshll.u32 %s773, 4
          %s777 = int_to_ptr.hbm [resolvable:$true] %s776
          %782 = dma.vmem_to_hbm [thread:$0]  %s775, 256, %s777, %s736, 128, 128, 8
        $region68: #{tpu_custom_call.1} parent=39 // pred_fallthru
          _
        // Predicated region
        $region69: #{tpu_custom_call.1} parent=39 // pred_check
          %p783 = pneg %p242
        $region70: #{tpu_custom_call.1} parent=39 // pred_check_branch
          %785 = sbr.rel (%p783) target = $region72
        $region71: #{tpu_custom_call.1} parent=39 // pred_region
          %s786 = smul.u32 2, %s37
          %788 = vsyncadd %s741, 0
          %s789 = smul.addr %s36, 4
          %s790 = sadd.s32 %s786, %s789
          %s791 = smul.addr %s790, 8
          %s792 = scalar_lea.hbm %s7, %s791
          %s793 = sshll.u32 %s744, 4
          %s794 = int_to_ptr.vmem [resolvable:$true] %s793
          %s795 = sshll.u32 %s792, 4
          %s796 = int_to_ptr.hbm [resolvable:$true] %s795
          %801 = dma.vmem_to_hbm [thread:$0]  %s794, 256, %s796, %s741, 128, 128, 8
        $region72: #{tpu_custom_call.1} parent=39 // pred_fallthru
          _
      $region40: #{tpu_custom_call.1} parent=5 // pred_fallthru
        _
      %p802 = scmp.le.s32.totalorder 2, %s27
      // Predicated region
      $region73: #{tpu_custom_call.1} parent=5 // pred_check
        %p803 = pneg %p802
      $region74: #{tpu_custom_call.1} parent=5 // pred_check_branch
        %805 = sbr.rel (%p803) target = $region76
      $region75: #{tpu_custom_call.1} parent=5 // pred_region
        %s806 = ssub.s32 %s27, 2
        // Predicated region
        $region77: #{tpu_custom_call.1} parent=75 // pred_check
          %p807 = pneg %p192
        $region78: #{tpu_custom_call.1} parent=75 // pred_check_branch
          %809 = sbr.rel (%p807) target = $region80
        $region79: #{tpu_custom_call.1} parent=75 // pred_region
          %s810 = sand.u32 %s177, 1
          %s811 = scalar_lea.sflag [#allocation4], %s810
          %s812 = sand.u32 %s177, 1
          %s813 = smul.addr %s812, 16
          %s814 = scalar_lea.vmem [#allocation11], %s813
          %816 = dma.done %s811, 256
        $region80: #{tpu_custom_call.1} parent=75 // pred_fallthru
          _
        // Predicated region
        $region81: #{tpu_custom_call.1} parent=75 // pred_check
          %p817 = pneg %p220
        $region82: #{tpu_custom_call.1} parent=75 // pred_check_branch
          %819 = sbr.rel (%p817) target = $region84
        $region83: #{tpu_custom_call.1} parent=75 // pred_region
          %s820 = sand.u32 %s33, 1
          %s821 = scalar_lea.sflag [#allocation13], %s820
          %s822 = sand.u32 %s205, 1
          %s823 = smul.addr %s822, 16
          %s824 = scalar_lea.vmem [#allocation12], %s823
          %826 = dma.done %s821, 256
        $region84: #{tpu_custom_call.1} parent=75 // pred_fallthru
          _
        // Predicated region
        $region85: #{tpu_custom_call.1} parent=75 // pred_check
          %p827 = pneg %p248
        $region86: #{tpu_custom_call.1} parent=75 // pred_check_branch
          %829 = sbr.rel (%p827) target = $region88
        $region87: #{tpu_custom_call.1} parent=75 // pred_region
          %s830 = sand.u32 %s33, 1
          %s831 = scalar_lea.sflag [#allocation13], %s830
          %s832 = sand.u32 %s233, 1
          %s833 = smul.addr %s832, 16
          %s834 = scalar_lea.vmem [#allocation14], %s833
          %836 = dma.done %s831, 256
        $region88: #{tpu_custom_call.1} parent=75 // pred_fallthru
          _
      $region76: #{tpu_custom_call.1} parent=5 // pred_fallthru
        _
    $region6: #{tpu_custom_call.1} parent=1 // loop_footer
      %s31 = sadd.s32 1, %s27
    $region7: #{tpu_custom_call.1} parent=1 // loop_footer_branch
      %26 = sbr.rel target = $region3
    $region8: #{tpu_custom_call.1} parent=1 // loop_exit
      _
    %837 = vsyncpa [#allocation3], 1
    %s838 = scalar_lea.sflag [#allocation3], 1
    %839 = vsyncpa %s838, 1
    %840 = vsyncpa [#allocation6], 1
    %841 = vsyncpa [#allocation9], 1
    %s842 = scalar_lea.sflag [#allocation9], 1
    %843 = vsyncpa %s842, 1
    %844 = vsyncpa [#allocation4], 1
    %s845 = scalar_lea.sflag [#allocation4], 1
    %846 = vsyncpa %s845, 1
    %847 = vsyncpa [#allocation13], 1
    %s848 = scalar_lea.sflag [#allocation13], 1
    %849 = vsyncpa %s848, 1

</llo_original>
